<compile_context>
chip_gen: v7x
topology: tpu7x:2x2x1
jax: 0.10.0
libtpu: 0.0.40
codegen_flags: <defaults>
</compile_context>

<pallas_src>
import functools

import jax
import jax.numpy as jnp
from jax import lax
from jax.experimental import pallas as pl
from jax.experimental.pallas import tpu as pltpu

LANES = 128


def _round_up(x, m):
    return (x + m - 1) // m * m


# ----------------------------------------------------------------------------
# Fused kernel: all TemporalBlocks + linear head + log_softmax,
# one batch element per grid step.
# ----------------------------------------------------------------------------
def make_tcn_kernel(L, kernel_size, block_meta, head_meta, out_dim):
    k = kernel_size
    lin_off, linb_idx = head_meta

    def kernel(x_ref, w_ref, b_ref, o_ref):
        # x_ref : (L, 1)    f32  -- one batch element, time along sublanes
        # w_ref : (Rw, 128) bf16 -- packed conv / downsample / linear weights
        # b_ref : (8, 128)  f32  -- packed bias rows
        # o_ref : (8, 128)  f32  -- broadcast log-probs (lane-dense full tile)
        row_t = lax.broadcasted_iota(jnp.int32, (L, LANES), 0)
        lane = lax.broadcasted_iota(jnp.int32, (L, LANES), 1)

        def shifted(v, s):
            # v[t] -> v[t - s]; rows t < s become the causal zero padding.
            # Invariant: s = d*(k-1) < L (asserted in the wrapper).
            if s == 0:
                return v
            r = pltpu.roll(v, shift=s, axis=0)          # XLU
            return jnp.where(row_t >= s, r, 0.0)        # VPU (f32)

        def conv(h, w_off, b_idx, d):
            # Fused k-tap dilated causal conv: lane-concat of the shifted
            # slabs against one (k*128, 128) packed weight chunk -> 1 matmul.
            lhs = jnp.concatenate(
                [shifted(h, d * (k - 1 - j)) for j in range(k)], axis=-1)
            w = w_ref[w_off:w_off + k * LANES, :]
            acc = jnp.dot(lhs.astype(jnp.bfloat16), w,
                          preferred_element_type=jnp.float32)
            return acc + b_ref[b_idx:b_idx + 1, :]

        # Lift the single input channel into lane 0 of a 128-lane slab.
        x = x_ref[...].astype(jnp.float32)               # (L, 1)
        h = jnp.where(lane == 0, x, 0.0)                 # (L, 128)

        for (d, w1, b1, w2, b2, down, wd, bd) in block_meta:
            h1 = jnp.maximum(conv(h, w1, b1, d), 0.0)
            h2 = jnp.maximum(conv(h1, w2, b2, d), 0.0)
            if down:                                     # 1x1 downsample conv
                res = jnp.dot(h.astype(jnp.bfloat16),
                              w_ref[wd:wd + LANES, :],
                              preferred_element_type=jnp.float32)
                res = res + b_ref[bd:bd + 1, :]
            else:
                res = h
            h = jnp.maximum(h2 + res, 0.0)
            # dropout layers are identity at inference

        # Last timestep (t = L-1) via an exact masked sublane reduce (XLU).
        last = jnp.sum(jnp.where(row_t == L - 1, h, 0.0),
                       axis=0, keepdims=True)            # (1, 128)

        logits = jnp.dot(last.astype(jnp.bfloat16),
                         w_ref[lin_off:lin_off + LANES, :],
                         preferred_element_type=jnp.float32)
        logits = logits + b_ref[linb_idx:linb_idx + 1, :]   # (1, 128)

        # log_softmax over the first out_dim lanes only (rest is padding).
        col = lax.broadcasted_iota(jnp.int32, (1, LANES), 1)
        valid = col < out_dim
        lm = jnp.where(valid, logits, -1e30)
        m = jnp.max(lm, axis=-1, keepdims=True)
        e = jnp.where(valid, jnp.exp(lm - m), 0.0)
        lse = jnp.log(jnp.sum(e, axis=-1, keepdims=True)) + m
        logp = logits - lse          # lanes >= out_dim are junk; wrapper slices

        o_ref[...] = jnp.broadcast_to(logp, (8, LANES))  # full-tile lane-dense store

    return kernel


def tcn_pallas_forward(x3d, wpk, bpk, *, block_meta, head_meta, kernel_size,
                       out_dim):
    N, L, _ = x3d.shape
    max_shift = max(m[0] for m in block_meta) * (kernel_size - 1)
    assert max_shift < L, "causal roll+mask shift must stay within one batch block"
    assert out_dim <= LANES
    Rw, Rb = wpk.shape[0], bpk.shape[0]

    kernel = make_tcn_kernel(L, kernel_size, block_meta, head_meta, out_dim)

    return pl.pallas_call(
        kernel,
        grid=(N,),
        in_specs=[
            pl.BlockSpec((None, L, 1), lambda b: (b, 0, 0)),   # per-batch time rows
            pl.BlockSpec((Rw, LANES), lambda b: (0, 0)),       # weight slab: resident
            pl.BlockSpec((Rb, LANES), lambda b: (0, 0)),       # bias slab:   resident
        ],
        out_specs=pl.BlockSpec((None, 8, LANES), lambda b: (b, 0, 0)),
        out_shape=jax.ShapeDtypeStruct((N, 8, LANES), jnp.float32),
        compiler_params=pltpu.CompilerParams(
            dimension_semantics=("parallel",)),  # v7x: batch across both TCs
    )(x3d, wpk, bpk)


# ----------------------------------------------------------------------------
# Parameter construction (deterministic, weight-norm applied in glue)
# ----------------------------------------------------------------------------
def weight_norm_eff(v, g):
    # v: (k, Cin, Cout), g: (1, 1, Cout); norm over (k, Cin) per out channel
    norm = jnp.sqrt(jnp.sum(v * v, axis=(0, 1), keepdims=True))
    return v * (g / norm)


def init_params(key, num_inputs, num_channels, kernel_size, output_size):
    blocks = []
    in_c = num_inputs
    for i, out_c in enumerate(num_channels):
        key, k1, k2, k3, k4, k5, k6, k7, k8 = jax.random.split(key, 9)
        v1 = jax.random.normal(k1, (kernel_size, in_c, out_c), jnp.float32) * 0.01
        g1 = 1.0 + 0.1 * jax.random.normal(k2, (1, 1, out_c), jnp.float32)
        v2 = jax.random.normal(k3, (kernel_size, out_c, out_c), jnp.float32) * 0.01
        g2 = 1.0 + 0.1 * jax.random.normal(k4, (1, 1, out_c), jnp.float32)
        blk = {
            "w1": weight_norm_eff(v1, g1),
            "b1": 0.05 * jax.random.normal(k5, (1, out_c), jnp.float32),
            "w2": weight_norm_eff(v2, g2),
            "b2": 0.05 * jax.random.normal(k6, (1, out_c), jnp.float32),
        }
        if in_c != out_c:  # downsample 1x1 conv
            blk["wd"] = jax.random.normal(k7, (in_c, out_c), jnp.float32) * 0.01
            blk["bd"] = 0.05 * jax.random.normal(k8, (1, out_c), jnp.float32)
        blocks.append(blk)
        in_c = out_c
    key, kl1, kl2 = jax.random.split(key, 3)
    return {
        "blocks": blocks,
        "lin_w": jax.random.normal(kl1, (num_channels[-1], output_size),
                                   jnp.float32) * 0.1,
        "lin_b": 0.05 * jax.random.normal(kl2, (1, output_size), jnp.float32),
    }


def round_to_bf16(tree):
    # Make every parameter exactly bf16-representable so the in-kernel bf16
    # weight slab and the f32 reference use identical values.
    return jax.tree_util.tree_map(
        lambda a: a.astype(jnp.bfloat16).astype(jnp.float32), tree)


def pack_tcn_params(params, kernel_size):
    """Pack all weights into one bf16 (R,128) slab and all biases into one
    f32 (8m,128) slab; return static row offsets for in-kernel views."""
    k = kernel_size
    w_chunks, b_rows = [], []
    row_off = 0

    def add_conv(w):                       # (k, cin, cout) -> (k*128, 128)
        nonlocal row_off
        cin, cout = int(w.shape[1]), int(w.shape[2])
        chunk = jnp.zeros((k * LANES, LANES), jnp.float32)
        for j in range(k):
            chunk = chunk.at[j * LANES:j * LANES + cin, :cout].set(w[j])
        w_chunks.append(chunk)
        off = row_off
        row_off += k * LANES
        return off

    def add_mat(w):                        # (cin, cout) -> (128, 128)
        nonlocal row_off
        cin, cout = int(w.shape[0]), int(w.shape[1])
        w_chunks.append(jnp.zeros((LANES, LANES), jnp.float32)
                        .at[:cin, :cout].set(w))
        off = row_off
        row_off += LANES
        return off

    def add_bias(b):                       # (1, c) -> one 128-lane row
        b_rows.append(jnp.zeros((1, LANES), jnp.float32)
                      .at[:, :int(b.shape[1])].set(b))
        return len(b_rows) - 1

    block_meta = []
    for i, blk in enumerate(params["blocks"]):
        has_down = "wd" in blk
        block_meta.append((
            2 ** i,
            add_conv(blk["w1"]), add_bias(blk["b1"]),
            add_conv(blk["w2"]), add_bias(blk["b2"]),
            has_down,
            add_mat(blk["wd"]) if has_down else -1,
            add_bias(blk["bd"]) if has_down else -1,
        ))

    lin_off = add_mat(params["lin_w"])
    linb_idx = add_bias(params["lin_b"])

    wpk = jnp.concatenate(w_chunks, axis=0).astype(jnp.bfloat16)
    nb = len(b_rows)
    nb_pad = max(_round_up(nb, 8), 8)
    if nb_pad > nb:
        b_rows.append(jnp.zeros((nb_pad - nb, LANES), jnp.float32))
    bpk = jnp.concatenate(b_rows, axis=0)
    return wpk, bpk, tuple(block_meta), (lin_off, linb_idx)


# ----------------------------------------------------------------------------
# Full forward
# ----------------------------------------------------------------------------
@functools.partial(jax.jit,
                   static_argnames=("block_meta", "head_meta", "kernel_size",
                                    "out_dim"))
def tcn_forward(inputs, wpk, bpk, noise_key, *, block_meta, head_meta,
                kernel_size, out_dim):
    N = inputs.shape[0]
    x = inputs.reshape(N, 1, -1).astype(jnp.float32)   # (N, 1, L)  NCL
    L = x.shape[2]

    # Series mixing: the learnable mask is identically zero, so the bilinear
    # interpolation of it is zero, sigmoid(0)=0.5, and the normalized K=2
    # mixture is exactly 0.5*x + 0.5*(x + noise) = x + 0.5*noise.
    # TODO(synk): reinstate the full interpolate/sigmoid/normalize path if a
    # nonzero mask is ever used.
    noise = jax.random.normal(noise_key, x.shape, jnp.float32) * 0.2 + 0.0
    x = x + 0.5 * noise

    x3d = x.reshape(N, L, 1)   # time along sublanes, single channel lane
    out = tcn_pallas_forward(x3d, wpk, bpk, block_meta=block_meta,
                             head_meta=head_meta, kernel_size=kernel_size,
                             out_dim=out_dim)
    return out[:, 0, :out_dim]


# ----------------------------------------------------------------------------
# Pure-JAX reference (independent pad+slice formulation) for validation
# ----------------------------------------------------------------------------
def tcn_reference(inputs, params, noise_key, *, kernel_size):
    N = inputs.shape[0]
    x = inputs.reshape(N, 1, -1).astype(jnp.float32)
    L = x.shape[2]
    noise = jax.random.normal(noise_key, x.shape, jnp.float32) * 0.2
    x = x + 0.5 * noise
    h = jnp.transpose(x, (0, 2, 1))                    # (N, L, Cin)
    hp = jax.lax.Precision.HIGHEST
    k = kernel_size
    for i, blk in enumerate(params["blocks"]):
        d = 2 ** i
        p = d * (k - 1)

        def conv(v, w, b):
            vpad = jnp.pad(v, ((0, 0), (p, 0), (0, 0)))
            acc = jnp.zeros(v.shape[:2] + (w.shape[-1],), jnp.float32)
            for j in range(k):
                acc = acc + jnp.einsum("nlc,co->nlo",
                                       vpad[:, j * d:j * d + L, :], w[j],
                                       precision=hp)
            return acc + b

        h1 = jax.nn.relu(conv(h, blk["w1"], blk["b1"]))
        h2 = jax.nn.relu(conv(h1, blk["w2"], blk["b2"]))
        if "wd" in blk:
            res = jnp.einsum("nlc,co->nlo", h, blk["wd"], precision=hp) + blk["bd"]
        else:
            res = h
        h = jax.nn.relu(h2 + res)
    logits = jnp.dot(h[:, -1, :], params["lin_w"], precision=hp) + params["lin_b"]
    return jax.nn.log_softmax(logits, axis=1)


if __name__ == "__main__":
    # Model config: TCN(input_size=1, output_size=10, num_channels=[32, 32],
    #                   kernel_size=2, dropout=0.2)
    num_channels = (32, 32)
    kernel_size = 2
    output_size = 10

    key = jax.random.PRNGKey(0)
    key, pkey, xkey, nkey = jax.random.split(key, 4)

    params = init_params(pkey, num_inputs=1, num_channels=num_channels,
                         kernel_size=kernel_size, output_size=output_size)
    params = round_to_bf16(params)   # identical params for kernel + reference

    wpk, bpk, block_meta, head_meta = pack_tcn_params(params, kernel_size)

    # inputs (N, C_in, L_in) -> flattened internally to (N, 1, C_in*L_in)
    inputs = jax.random.normal(xkey, (2, 4, 16), jnp.float32)

    out = tcn_forward(inputs, wpk, bpk, nkey, block_meta=block_meta,
                      head_meta=head_meta, kernel_size=kernel_size,
                      out_dim=output_size)
    out = jax.block_until_ready(out)

    assert out.shape == (2, output_size)
    # log_softmax rows must exp-sum to 1
    assert jnp.allclose(jnp.sum(jnp.exp(out), axis=1), 1.0, atol=1e-4)

    # Validate against an independent pure-JAX implementation.  Weights are
    # identical (bf16-rounded); the only divergence is bf16 activation
    # rounding at the kernel's MXU inputs, hence the slightly looser tol.
    ref = tcn_reference(inputs, params, nkey, kernel_size=kernel_size)
    assert jnp.allclose(out, ref, atol=2e-2, rtol=2e-2)

    print("KERNEL_OK")
</pallas_src>

<mosaic_0001>
module attributes {stable_mosaic.version = 11 : i64} {
  func.func @kernel(%arg0: i32, %arg1: memref<1x64x1xf32, #tpu.memory_space<vmem>>, %arg2: memref<1280x128xbf16, #tpu.memory_space<vmem>>, %arg3: memref<8x128xf32, #tpu.memory_space<vmem>>, %arg4: memref<1x8x128xf32, #tpu.memory_space<vmem>>) attributes {dimension_semantics = [#tpu.dimension_semantics<parallel>], iteration_bounds = array<i64: 2>, scalar_prefetch = 0 : i64, scratch_operands = 0 : i64, tpu.core_type = #tpu.core_type<tc>, window_params = [{transform_indices = @transform_0, window_bounds = array<i64: 1, 64, 1>}, {pipeline_mode = #tpu.pipeline_mode<synchronous>, transform_indices = @transform_1, window_bounds = array<i64: 1280, 128>}, {pipeline_mode = #tpu.pipeline_mode<synchronous>, transform_indices = @transform_2, window_bounds = array<i64: 8, 128>}, {transform_indices = @transform_3, window_bounds = array<i64: 1, 8, 128>}]} {
    %0 = tpu.iota {dimensions = array<i32: 0>} : vector<64x128xi32>
    %1 = tpu.iota {dimensions = array<i32: 1>} : vector<64x128xi32>
    %c0 = arith.constant 0 : index
    %c0_0 = arith.constant 0 : index
    %c0_1 = arith.constant 0 : index
    %2 = vector.load %arg1[%c0, %c0_0, %c0_1] : memref<1x64x1xf32, #tpu.memory_space<vmem>>, vector<1x64x1xf32>
    %3 = vector.shape_cast %2 : vector<1x64x1xf32> to vector<64x1xf32>
    %c0_i32 = arith.constant 0 : i32
    %4 = vector.broadcast %c0_i32 : i32 to vector<64x128xi32>
    %5 = arith.cmpi eq, %1, %4 : vector<64x128xi32>
    %cst = arith.constant 0.000000e+00 : f32
    %6 = vector.shape_cast %3 : vector<64x1xf32> to vector<64x1xf32>
    %7 = vector.broadcast %6 : vector<64x1xf32> to vector<64x128xf32>
    %8 = vector.broadcast %cst : f32 to vector<64x128xf32>
    %9 = arith.select %5, %7, %8 : vector<64x128xi1>, vector<64x128xf32>
    %c1_i32 = arith.constant 1 : i32
    %10 = tpu.dynamic_rotate %9 by %c1_i32 dim 0 : vector<64x128xf32>, i32 -> vector<64x128xf32>
    %c1_i32_2 = arith.constant 1 : i32
    %11 = vector.broadcast %c1_i32_2 : i32 to vector<64x128xi32>
    %12 = arith.cmpi sge, %0, %11 : vector<64x128xi32>
    %cst_3 = arith.constant 0.000000e+00 : f32
    %13 = vector.broadcast %cst_3 : f32 to vector<64x128xf32>
    %14 = arith.select %12, %10, %13 : vector<64x128xi1>, vector<64x128xf32>
    %15 = tpu.concatenate %14, %9 in 1 : vector<64x128xf32>, vector<64x128xf32> -> vector<64x256xf32>
    %c0_4 = arith.constant 0 : index
    %c0_5 = arith.constant 0 : index
    %16 = vector.load %arg2[%c0_4, %c0_5] : memref<1280x128xbf16, #tpu.memory_space<vmem>>, vector<256x128xbf16>
    %17 = arith.truncf %15 : vector<64x256xf32> to vector<64x256xbf16>
    %cst_6 = arith.constant dense<0.000000e+00> : vector<64x128xf32>
    %18 = tpu.matmul %17, %16, %cst_6 {dimension_numbers = #tpu.dot_dimension_numbers<[1], [0], [0], [1], [0, 0, 1, 1], [], []>} : vector<64x256xbf16>, vector<256x128xbf16>, vector<64x128xf32> -> vector<64x128xf32>
    %c0_7 = arith.constant 0 : index
    %c0_8 = arith.constant 0 : index
    %19 = vector.load %arg3[%c0_7, %c0_8] : memref<8x128xf32, #tpu.memory_space<vmem>>, vector<1x128xf32>
    %20 = vector.broadcast %19 : vector<1x128xf32> to vector<64x128xf32>
    %21 = arith.addf %18, %20 : vector<64x128xf32>
    %cst_9 = arith.constant 0.000000e+00 : f32
    %22 = vector.broadcast %cst_9 : f32 to vector<64x128xf32>
    %23 = arith.maximumf %21, %22 : vector<64x128xf32>
    %c1_i32_10 = arith.constant 1 : i32
    %24 = tpu.dynamic_rotate %23 by %c1_i32_10 dim 0 : vector<64x128xf32>, i32 -> vector<64x128xf32>
    %c1_i32_11 = arith.constant 1 : i32
    %25 = vector.broadcast %c1_i32_11 : i32 to vector<64x128xi32>
    %26 = arith.cmpi sge, %0, %25 : vector<64x128xi32>
    %cst_12 = arith.constant 0.000000e+00 : f32
    %27 = vector.broadcast %cst_12 : f32 to vector<64x128xf32>
    %28 = arith.select %26, %24, %27 : vector<64x128xi1>, vector<64x128xf32>
    %29 = tpu.concatenate %28, %23 in 1 : vector<64x128xf32>, vector<64x128xf32> -> vector<64x256xf32>
    %c256 = arith.constant 256 : index
    %c0_13 = arith.constant 0 : index
    %30 = vector.load %arg2[%c256, %c0_13] : memref<1280x128xbf16, #tpu.memory_space<vmem>>, vector<256x128xbf16>
    %31 = arith.truncf %29 : vector<64x256xf32> to vector<64x256xbf16>
    %cst_14 = arith.constant dense<0.000000e+00> : vector<64x128xf32>
    %32 = tpu.matmul %31, %30, %cst_14 {dimension_numbers = #tpu.dot_dimension_numbers<[1], [0], [0], [1], [0, 0, 1, 1], [], []>} : vector<64x256xbf16>, vector<256x128xbf16>, vector<64x128xf32> -> vector<64x128xf32>
    %c1 = arith.constant 1 : index
    %c0_15 = arith.constant 0 : index
    %33 = vector.load %arg3[%c1, %c0_15] : memref<8x128xf32, #tpu.memory_space<vmem>>, vector<1x128xf32>
    %34 = vector.broadcast %33 : vector<1x128xf32> to vector<64x128xf32>
    %35 = arith.addf %32, %34 : vector<64x128xf32>
    %cst_16 = arith.constant 0.000000e+00 : f32
    %36 = vector.broadcast %cst_16 : f32 to vector<64x128xf32>
    %37 = arith.maximumf %35, %36 : vector<64x128xf32>
    %38 = arith.truncf %9 : vector<64x128xf32> to vector<64x128xbf16>
    %c512 = arith.constant 512 : index
    %c0_17 = arith.constant 0 : index
    %39 = vector.load %arg2[%c512, %c0_17] : memref<1280x128xbf16, #tpu.memory_space<vmem>>, vector<128x128xbf16>
    %cst_18 = arith.constant dense<0.000000e+00> : vector<64x128xf32>
    %40 = tpu.matmul %38, %39, %cst_18 {dimension_numbers = #tpu.dot_dimension_numbers<[1], [0], [0], [1], [0, 0, 1, 1], [], []>} : vector<64x128xbf16>, vector<128x128xbf16>, vector<64x128xf32> -> vector<64x128xf32>
    %c2 = arith.constant 2 : index
    %c0_19 = arith.constant 0 : index
    %41 = vector.load %arg3[%c2, %c0_19] : memref<8x128xf32, #tpu.memory_space<vmem>>, vector<1x128xf32>
    %42 = vector.broadcast %41 : vector<1x128xf32> to vector<64x128xf32>
    %43 = arith.addf %40, %42 : vector<64x128xf32>
    %44 = arith.addf %37, %43 : vector<64x128xf32>
    %cst_20 = arith.constant 0.000000e+00 : f32
    %45 = vector.broadcast %cst_20 : f32 to vector<64x128xf32>
    %46 = arith.maximumf %44, %45 : vector<64x128xf32>
    %c2_i32 = arith.constant 2 : i32
    %47 = tpu.dynamic_rotate %46 by %c2_i32 dim 0 : vector<64x128xf32>, i32 -> vector<64x128xf32>
    %c2_i32_21 = arith.constant 2 : i32
    %48 = vector.broadcast %c2_i32_21 : i32 to vector<64x128xi32>
    %49 = arith.cmpi sge, %0, %48 : vector<64x128xi32>
    %cst_22 = arith.constant 0.000000e+00 : f32
    %50 = vector.broadcast %cst_22 : f32 to vector<64x128xf32>
    %51 = arith.select %49, %47, %50 : vector<64x128xi1>, vector<64x128xf32>
    %52 = tpu.concatenate %51, %46 in 1 : vector<64x128xf32>, vector<64x128xf32> -> vector<64x256xf32>
    %c640 = arith.constant 640 : index
    %c0_23 = arith.constant 0 : index
    %53 = vector.load %arg2[%c640, %c0_23] : memref<1280x128xbf16, #tpu.memory_space<vmem>>, vector<256x128xbf16>
    %54 = arith.truncf %52 : vector<64x256xf32> to vector<64x256xbf16>
    %cst_24 = arith.constant dense<0.000000e+00> : vector<64x128xf32>
    %55 = tpu.matmul %54, %53, %cst_24 {dimension_numbers = #tpu.dot_dimension_numbers<[1], [0], [0], [1], [0, 0, 1, 1], [], []>} : vector<64x256xbf16>, vector<256x128xbf16>, vector<64x128xf32> -> vector<64x128xf32>
    %c3 = arith.constant 3 : index
    %c0_25 = arith.constant 0 : index
    %56 = vector.load %arg3[%c3, %c0_25] : memref<8x128xf32, #tpu.memory_space<vmem>>, vector<1x128xf32>
    %57 = vector.broadcast %56 : vector<1x128xf32> to vector<64x128xf32>
    %58 = arith.addf %55, %57 : vector<64x128xf32>
    %cst_26 = arith.constant 0.000000e+00 : f32
    %59 = vector.broadcast %cst_26 : f32 to vector<64x128xf32>
    %60 = arith.maximumf %58, %59 : vector<64x128xf32>
    %c2_i32_27 = arith.constant 2 : i32
    %61 = tpu.dynamic_rotate %60 by %c2_i32_27 dim 0 : vector<64x128xf32>, i32 -> vector<64x128xf32>
    %c2_i32_28 = arith.constant 2 : i32
    %62 = vector.broadcast %c2_i32_28 : i32 to vector<64x128xi32>
    %63 = arith.cmpi sge, %0, %62 : vector<64x128xi32>
    %cst_29 = arith.constant 0.000000e+00 : f32
    %64 = vector.broadcast %cst_29 : f32 to vector<64x128xf32>
    %65 = arith.select %63, %61, %64 : vector<64x128xi1>, vector<64x128xf32>
    %66 = tpu.concatenate %65, %60 in 1 : vector<64x128xf32>, vector<64x128xf32> -> vector<64x256xf32>
    %c896 = arith.constant 896 : index
    %c0_30 = arith.constant 0 : index
    %67 = vector.load %arg2[%c896, %c0_30] : memref<1280x128xbf16, #tpu.memory_space<vmem>>, vector<256x128xbf16>
    %68 = arith.truncf %66 : vector<64x256xf32> to vector<64x256xbf16>
    %cst_31 = arith.constant dense<0.000000e+00> : vector<64x128xf32>
    %69 = tpu.matmul %68, %67, %cst_31 {dimension_numbers = #tpu.dot_dimension_numbers<[1], [0], [0], [1], [0, 0, 1, 1], [], []>} : vector<64x256xbf16>, vector<256x128xbf16>, vector<64x128xf32> -> vector<64x128xf32>
    %c4 = arith.constant 4 : index
    %c0_32 = arith.constant 0 : index
    %70 = vector.load %arg3[%c4, %c0_32] : memref<8x128xf32, #tpu.memory_space<vmem>>, vector<1x128xf32>
    %71 = vector.broadcast %70 : vector<1x128xf32> to vector<64x128xf32>
    %72 = arith.addf %69, %71 : vector<64x128xf32>
    %cst_33 = arith.constant 0.000000e+00 : f32
    %73 = vector.broadcast %cst_33 : f32 to vector<64x128xf32>
    %74 = arith.maximumf %72, %73 : vector<64x128xf32>
    %75 = arith.addf %74, %46 : vector<64x128xf32>
    %cst_34 = arith.constant 0.000000e+00 : f32
    %76 = vector.broadcast %cst_34 : f32 to vector<64x128xf32>
    %77 = arith.maximumf %75, %76 : vector<64x128xf32>
    %c63_i32 = arith.constant 63 : i32
    %78 = vector.broadcast %c63_i32 : i32 to vector<64x128xi32>
    %79 = arith.cmpi eq, %0, %78 : vector<64x128xi32>
    %cst_35 = arith.constant 0.000000e+00 : f32
    %80 = vector.broadcast %cst_35 : f32 to vector<64x128xf32>
    %81 = arith.select %79, %77, %80 : vector<64x128xi1>, vector<64x128xf32>
    %cst_36 = arith.constant dense<0.000000e+00> : vector<128xf32>
    %82 = vector.multi_reduction <add>, %81, %cst_36 [0] : vector<64x128xf32> to vector<128xf32>
    %83 = vector.shape_cast %82 : vector<128xf32> to vector<1x128xf32>
    %84 = arith.truncf %83 : vector<1x128xf32> to vector<1x128xbf16>
    %c1152 = arith.constant 1152 : index
    %c0_37 = arith.constant 0 : index
    %85 = vector.load %arg2[%c1152, %c0_37] : memref<1280x128xbf16, #tpu.memory_space<vmem>>, vector<128x128xbf16>
    %cst_38 = arith.constant dense<0.000000e+00> : vector<1x128xf32>
    %86 = tpu.matmul %84, %85, %cst_38 {dimension_numbers = #tpu.dot_dimension_numbers<[1], [0], [0], [1], [0, 0, 1, 1], [], []>} : vector<1x128xbf16>, vector<128x128xbf16>, vector<1x128xf32> -> vector<1x128xf32>
    %c5 = arith.constant 5 : index
    %c0_39 = arith.constant 0 : index
    %87 = vector.load %arg3[%c5, %c0_39] : memref<8x128xf32, #tpu.memory_space<vmem>>, vector<1x128xf32>
    %88 = arith.addf %86, %87 : vector<1x128xf32>
    %89 = tpu.iota {dimensions = array<i32: 1>} : vector<1x128xi32>
    %c10_i32 = arith.constant 10 : i32
    %90 = vector.broadcast %c10_i32 : i32 to vector<1x128xi32>
    %91 = arith.cmpi slt, %89, %90 : vector<1x128xi32>
    %cst_40 = arith.constant -1.000000e+30 : f32
    %92 = vector.broadcast %cst_40 : f32 to vector<1x128xf32>
    %93 = arith.select %91, %88, %92 : vector<1x128xi1>, vector<1x128xf32>
    %cst_41 = arith.constant dense<0xFF800000> : vector<1xf32>
    %94 = vector.multi_reduction <maximumf>, %93, %cst_41 [1] : vector<1x128xf32> to vector<1xf32>
    %95 = vector.shape_cast %94 : vector<1xf32> to vector<1x1xf32>
    %96 = vector.broadcast %95 : vector<1x1xf32> to vector<1x128xf32>
    %97 = arith.subf %93, %96 : vector<1x128xf32>
    %98 = math.exp %97 : vector<1x128xf32>
    %cst_42 = arith.constant 0.000000e+00 : f32
    %99 = vector.broadcast %cst_42 : f32 to vector<1x128xf32>
    %100 = arith.select %91, %98, %99 : vector<1x128xi1>, vector<1x128xf32>
    %cst_43 = arith.constant dense<0.000000e+00> : vector<1xf32>
    %101 = vector.multi_reduction <add>, %100, %cst_43 [1] : vector<1x128xf32> to vector<1xf32>
    %102 = vector.shape_cast %101 : vector<1xf32> to vector<1x1xf32>
    %103 = math.log %102 : vector<1x1xf32>
    %104 = arith.addf %103, %95 : vector<1x1xf32>
    %105 = vector.broadcast %104 : vector<1x1xf32> to vector<1x128xf32>
    %106 = arith.subf %88, %105 : vector<1x128xf32>
    %107 = vector.shape_cast %106 : vector<1x128xf32> to vector<1x128xf32>
    %108 = vector.broadcast %107 : vector<1x128xf32> to vector<8x128xf32>
    %c0_44 = arith.constant 0 : index
    %c0_45 = arith.constant 0 : index
    %c0_46 = arith.constant 0 : index
    %109 = vector.load %arg4[%c0_44, %c0_45, %c0_46] : memref<1x8x128xf32, #tpu.memory_space<vmem>>, vector<1x8x128xf32>
    %110 = vector.shape_cast %109 : vector<1x8x128xf32> to vector<8x128xf32>
    %111 = vector.shape_cast %108 : vector<8x128xf32> to vector<1x8x128xf32>
    tpu.vector_store %arg4[%c0_44, %c0_45, %c0_46], %111 {strides = array<i32>} : memref<1x8x128xf32, #tpu.memory_space<vmem>>, vector<1x8x128xf32>,
    return
  }
  func.func @transform_0(%arg0: i32) -> (i32, i32, i32) {
    %c0_i32 = arith.constant 0 : i32
    %c0_i32_0 = arith.constant 0 : i32
    %c0_i32_1 = arith.constant 0 : i32
    return %arg0, %c0_i32, %c0_i32_0 : i32, i32, i32
  }
  func.func @transform_1(%arg0: i32) -> (i32, i32) {
    %c0_i32 = arith.constant 0 : i32
    %c0_i32_0 = arith.constant 0 : i32
    %c0_i32_1 = arith.constant 0 : i32
    return %c0_i32, %c0_i32_0 : i32, i32
  }
  func.func @transform_2(%arg0: i32) -> (i32, i32) {
    %c0_i32 = arith.constant 0 : i32
    %c0_i32_0 = arith.constant 0 : i32
    %c0_i32_1 = arith.constant 0 : i32
    return %c0_i32, %c0_i32_0 : i32, i32
  }
  func.func @transform_3(%arg0: i32) -> (i32, i32, i32) {
    %c0_i32 = arith.constant 0 : i32
    %c0_i32_0 = arith.constant 0 : i32
    %c0_i32_1 = arith.constant 0 : i32
    return %arg0, %c0_i32, %c0_i32_0 : i32, i32, i32
  }
}

</mosaic_0001>

<llo_original>
// kernel: tcn_forward.1
$region0: #{tcn_forward.1}
  #allocation0 [shape = 'u32[]', space=smem, size = 0x4, offset = 0x4, fixed_abs, tag = 'smem constant byte address 0x4 - core index']
  #allocation1 [shape = 'u32[144,128]{1,0:T(1,128)}', space=vmem, size = 0x12000, scoped, tag = 'internal scratch']
  %s0 = inlined_call_operand.vmem [shape: f32[2,64,1], index: 0, kind: input, shape index: {}]
  %s1 = inlined_call_operand.hbm [shape: bf16[1280,128], index: 1, kind: input, shape index: {}]
  %s2 = inlined_call_operand.vmem [shape: f32[8,128], index: 2, kind: input, shape index: {}]
  %s3 = inlined_call_operand.vmem [shape: f32[2,8,128], index: 3, kind: output, shape index: {}]
  %s4 = sld [smem:[#allocation0]]
  $region49: #{tcn_forward.1} parent=0
    _
  %s6 = ssub.s32 1, %s4
  %s7 = scalar_select 0, %s6, %s4
  $region1: #{tcn_forward.1} parent=0
    #allocation2 [shape = 'u8[327680]{0}', space=vmem, size = 0x50000, scoped, tag = 'input window, operand 1, single buffered']
    #allocation3 [shape = 's32[2]{0}', space=sflag, size = 0x8, scoped, tag = 'scoped memory for tcn_forward.1']
    %8 = vsyncpa [#allocation3], 0
    loop: start=0, step=1, limit=4
    $region2: #{tcn_forward.1} parent=1 // loop_pre_header
      _
    $region3: #{tcn_forward.1} parent=1 // loop_header
      %s10 = sphi 0, %s14
      %p11 = scmp.ge.s32.totalorder %s10, 4
      %s20 = sphi 0, %s22
      %s23 = sphi 0, %s20
      %s24 = sphi 0, %s23
      %s40 = sphi 0, %s24
      %s44 = sphi 0, %s44
      %s46 = sphi 0, %s44
      %s47 = sphi 0, %s46
      %s61 = sphi 0, %s47
      %s65 = sphi 0, %s65
      %s67 = sphi 0, %s65
      %s68 = sphi 0, %s67
      %s82 = sphi 0, %s68
      %s88 = sphi 0, %s90
      %s91 = sphi 0, %s88
      %s92 = sphi 0, %s91
      %s108 = sphi 0, %s92
    $region4: #{tcn_forward.1} parent=1 // loop_header_branch
      %13 = sbr.rel (%p11) target = $region8
    $region5: #{tcn_forward.1} parent=1 // loop_body
      %s15 = ssub.s32 %s10, 1
      %s16 = ssub.s32 %s10, 2
      %s17 = sadd.s32 %s10, 1
      %s18 = ssub.s32 %s10, %s17
      %p19 = scmp.eq.s32.totalorder %s18, 0
      %s21 = sadd.s32 %s20, 1
      %s22 = scalar_select %p19, %s20, %s21
      %p25 = pneg %p19
      %p26 = scmp.eq.s32.totalorder %s10, 1
      %p27 = por %p25, %p26
      %p28 = scmp.ne.s32.totalorder %s20, %s23
      %p29 = scmp.eq.s32.totalorder %s10, 0
      %p30 = por %p28, %p29
      %p31 = scmp.ne.s32.totalorder %s20, %s23
      %p32 = scmp.eq.s32.totalorder %s15, 1
      %p33 = por %p31, %p32
      %p34 = scmp.ne.s32.totalorder %s23, %s24
      %p35 = scmp.eq.s32.totalorder %s15, 0
      %p36 = por %p34, %p35
      %p37 = scmp.ne.s32.totalorder %s23, %s24
      %p38 = scmp.eq.s32.totalorder %s16, 1
      %p39 = por %p37, %p38
      %p41 = scmp.ne.s32.totalorder %s24, %s40
      %p42 = scmp.eq.s32.totalorder %s16, 0
      %p43 = por %p41, %p42
      %s45 = sadd.s32 %s44, 1
      %p48 = scmp.eq.s32.totalorder %s10, 1
      %p49 = scmp.ne.s32.totalorder %s44, %s46
      %p50 = scmp.eq.s32.totalorder %s10, 0
      %p51 = por %p49, %p50
      %p52 = scmp.ne.s32.totalorder %s44, %s46
      %p53 = scmp.eq.s32.totalorder %s15, 1
      %p54 = por %p52, %p53
      %p55 = scmp.ne.s32.totalorder %s46, %s47
      %p56 = scmp.eq.s32.totalorder %s15, 0
      %p57 = por %p55, %p56
      %p58 = scmp.ne.s32.totalorder %s46, %s47
      %p59 = scmp.eq.s32.totalorder %s16, 1
      %p60 = por %p58, %p59
      %p62 = scmp.ne.s32.totalorder %s47, %s61
      %p63 = scmp.eq.s32.totalorder %s16, 0
      %p64 = por %p62, %p63
      %s66 = sadd.s32 %s65, 1
      %p69 = scmp.eq.s32.totalorder %s10, 1
      %p70 = scmp.ne.s32.totalorder %s65, %s67
      %p71 = scmp.eq.s32.totalorder %s10, 0
      %p72 = por %p70, %p71
      %p73 = scmp.ne.s32.totalorder %s65, %s67
      %p74 = scmp.eq.s32.totalorder %s15, 1
      %p75 = por %p73, %p74
      %p76 = scmp.ne.s32.totalorder %s67, %s68
      %p77 = scmp.eq.s32.totalorder %s15, 0
      %p78 = por %p76, %p77
      %p79 = scmp.ne.s32.totalorder %s67, %s68
      %p80 = scmp.eq.s32.totalorder %s16, 1
      %p81 = por %p79, %p80
      %p83 = scmp.ne.s32.totalorder %s68, %s82
      %p84 = scmp.eq.s32.totalorder %s16, 0
      %p85 = por %p83, %p84
      %s86 = ssub.s32 %s10, %s17
      %p87 = scmp.eq.s32.totalorder %s86, 0
      %s89 = sadd.s32 %s88, 1
      %s90 = scalar_select %p87, %s88, %s89
      %p93 = pneg %p87
      %p94 = scmp.eq.s32.totalorder %s10, 1
      %p95 = por %p93, %p94
      %p96 = scmp.ne.s32.totalorder %s88, %s91
      %p97 = scmp.eq.s32.totalorder %s10, 0
      %p98 = por %p96, %p97
      %p99 = scmp.ne.s32.totalorder %s88, %s91
      %p100 = scmp.eq.s32.totalorder %s15, 1
      %p101 = por %p99, %p100
      %p102 = scmp.ne.s32.totalorder %s91, %s92
      %p103 = scmp.eq.s32.totalorder %s15, 0
      %p104 = por %p102, %p103
      %p105 = scmp.ne.s32.totalorder %s91, %s92
      %p106 = scmp.eq.s32.totalorder %s16, 1
      %p107 = por %p105, %p106
      %p109 = scmp.ne.s32.totalorder %s92, %s108
      %p110 = scmp.eq.s32.totalorder %s16, 0
      %p111 = por %p109, %p110
      %p112 = scmp.le.s32.totalorder 1, %s10
      %p113 = scmp.lt.s32.totalorder %s10, 3
      %p114 = pnand %p112, %p113
      %p115 = pneg %p114
      // Predicated region
      $region9: #{tcn_forward.1} parent=5 // pred_check
        _
      $region10: #{tcn_forward.1} parent=5 // pred_check_branch
        %117 = sbr.rel (%p114) target = $region12
      $region11: #{tcn_forward.1} parent=5 // pred_region
        %s118 = ssub.s32 %s10, 1
        // Predicated region
        $region13: #{tcn_forward.1} parent=11 // pred_check
          %p119 = pneg %p57
        $region14: #{tcn_forward.1} parent=11 // pred_check_branch
          %121 = sbr.rel (%p119) target = $region16
        $region15: #{tcn_forward.1} parent=11 // pred_region
          %s123 = ssub.s32 10240, 10240
          %124 = vsyncadd [#allocation3], %s123
          %s125 = sshll.u32 [#allocation2], 4
          %s126 = int_to_ptr.vmem [resolvable:$true] %s125
          %131 = dma.hbm_to_vmem [thread:$0]  %s1, 10240, %s126, [#allocation3], 64, 64, 4
        $region16: #{tcn_forward.1} parent=11 // pred_fallthru
          _
        // Predicated region
        $region17: #{tcn_forward.1} parent=11 // pred_check
          %p132 = pneg %p78
        $region18: #{tcn_forward.1} parent=11 // pred_check_branch
          %134 = sbr.rel (%p132) target = $region20
        $region19: #{tcn_forward.1} parent=11 // pred_region
          _
        $region20: #{tcn_forward.1} parent=11 // pred_fallthru
          _
      $region12: #{tcn_forward.1} parent=5 // pred_fallthru
        _
      %p135 = scmp.lt.s32.totalorder %s10, 2
      // Predicated region
      $region21: #{tcn_forward.1} parent=5 // pred_check
        %p136 = pneg %p135
      $region22: #{tcn_forward.1} parent=5 // pred_check_branch
        %138 = sbr.rel (%p136) target = $region24
      $region23: #{tcn_forward.1} parent=5 // pred_region
        // Predicated region
        $region25: #{tcn_forward.1} parent=23 // pred_check
          %p139 = pneg %p30
        $region26: #{tcn_forward.1} parent=23 // pred_check_branch
          %141 = sbr.rel (%p139) target = $region28
        $region27: #{tcn_forward.1} parent=23 // pred_region
          %p142 = scmp.lt.s32.totalorder %s10, 1
          %s143 = scalar_select %p142, %s10, 1
          %s144 = smul.addr %s143, 8
          %s145 = smul.addr %s144, 8
          %s146 = scalar_lea.vmem %s0, %s145
        $region28: #{tcn_forward.1} parent=23 // pred_fallthru
          _
      $region24: #{tcn_forward.1} parent=5 // pred_fallthru
        _
      %p147 = scmp.le.s32.totalorder 1, %s10
      %p148 = scmp.lt.s32.totalorder %s10, 3
      %p149 = pnand %p147, %p148
      %p150 = pneg %p149
      // Predicated region
      $region29: #{tcn_forward.1} parent=5 // pred_check
        _
      $region30: #{tcn_forward.1} parent=5 // pred_check_branch
        %152 = sbr.rel (%p149) target = $region32
      $region31: #{tcn_forward.1} parent=5 // pred_region
        %s153 = ssub.s32 %s10, 1
        // Predicated region
        $region33: #{tcn_forward.1} parent=31 // pred_check
          %p154 = pneg %p57
        $region34: #{tcn_forward.1} parent=31 // pred_check_branch
          %156 = sbr.rel (%p154) target = $region36
        $region35: #{tcn_forward.1} parent=31 // pred_region
          %157 = dma.done [#allocation3], 10240
        $region36: #{tcn_forward.1} parent=31 // pred_fallthru
          _
        %p158 = scmp.lt.s32.totalorder %s15, 1
        %s159 = scalar_select %p158, %s15, 1
        %s160 = smul.addr %s159, 8
        %s161 = smul.addr %s160, 8
        %s162 = scalar_lea.vmem %s0, %s161
        %p163 = pneg %p36
        %p164 = pneg %p33
        %p165 = pneg %p57
        %p166 = pneg %p54
        %p167 = pneg %p78
        %p168 = pneg %p75
        %p169 = pneg %p104
        %p170 = pneg %p101
        %p171 = scmp.lt.s32.totalorder %s15, 1
        %s172 = scalar_select %p171, %s15, 1
        %s173 = smul.addr %s172, 8
        %s174 = scalar_lea.vmem %s3, %s173
        %p175 = scmp.lt.s32.totalorder %s15, 1
        %s176 = scalar_select %p175, %s15, 1
        %s177 = smul.addr %s176, 8
        %s178 = smul.addr %s177, 8
        %s179 = scalar_lea.vmem %s0, %s178
        %p180 = scmp.lt.s32.totalorder %s15, 1
        %s181 = scalar_select %p180, %s15, 1
        %s182 = smul.addr %s181, 8
        %s183 = scalar_lea.vmem %s3, %s182
        %v185 = vlaneseq
        %v186 = vshrl.u32 %v185, 7
        %v187 = vadd.s32 %v186, 8
        %v188 = vadd.s32 %v186, 16
        %v189 = vadd.s32 %v186, 24
        %v190 = vadd.s32 %v186, 32
        %v191 = vadd.s32 %v186, 40
        %v192 = vadd.s32 %v186, 48
        %v193 = vadd.s32 %v186, 56
        %v194 = vlaneseq
        %v195 = vand.u32 %v194, 127
        %v196 = vld [vmem:[%s179] sm:$0xff]
        %v197 = vld [vmem:[%s179 + $0x8] sm:$0xff]
        %v198 = vld [vmem:[%s179 + $0x10] sm:$0xff]
        %v199 = vld [vmem:[%s179 + $0x18] sm:$0xff]
        %v200 = vld [vmem:[%s179 + $0x20] sm:$0xff]
        %v201 = vld [vmem:[%s179 + $0x28] sm:$0xff]
        %v202 = vld [vmem:[%s179 + $0x30] sm:$0xff]
        %v203 = vld [vmem:[%s179 + $0x38] sm:$0xff]
        %vm204 = vcmp.eq.s32.totalorder %v195, 0
        %206 = vset.pattern.permute.xlu0 0
        %207 = vperm.xlu0 %206, %v196
        %v208 = vpop.permute.xlu0 %207
        %211 = vset.pattern.permute.xlu0 0
        %212 = vperm.xlu0 %211, %v197
        %v213 = vpop.permute.xlu0 %212
        %216 = vset.pattern.permute.xlu0 0
        %217 = vperm.xlu0 %216, %v198
        %v218 = vpop.permute.xlu0 %217
        %221 = vset.pattern.permute.xlu0 0
        %222 = vperm.xlu0 %221, %v199
        %v223 = vpop.permute.xlu0 %222
        %226 = vset.pattern.permute.xlu0 0
        %227 = vperm.xlu0 %226, %v200
        %v228 = vpop.permute.xlu0 %227
        %231 = vset.pattern.permute.xlu0 0
        %232 = vperm.xlu0 %231, %v201
        %v233 = vpop.permute.xlu0 %232
        %236 = vset.pattern.permute.xlu0 0
        %237 = vperm.xlu0 %236, %v202
        %v238 = vpop.permute.xlu0 %237
        %241 = vset.pattern.permute.xlu0 0
        %242 = vperm.xlu0 %241, %v203
        %v243 = vpop.permute.xlu0 %242
        %v245 = vsel %vm204, %v208, 0.0
        %v246 = vsel %vm204, %v213, 0.0
        %v247 = vsel %vm204, %v218, 0.0
        %v248 = vsel %vm204, %v223, 0.0
        %v249 = vsel %vm204, %v228, 0.0
        %v250 = vsel %vm204, %v233, 0.0
        %v251 = vsel %vm204, %v238, 0.0
        %v252 = vsel %vm204, %v243, 0.0
        %v253 = vrot.slane %v245, 7
        %v254 = vrot.slane %v246, 7
        %v255 = vrot.slane %v247, 7
        %v256 = vrot.slane %v248, 7
        %v257 = vrot.slane %v249, 7
        %v258 = vrot.slane %v250, 7
        %v259 = vrot.slane %v251, 7
        %v260 = vrot.slane %v252, 7
        %vm261 = vcmp.lt.s32.totalorder %v186, 1
        %v262 = vsel %vm261, %v259, %v260
        %v263 = vsel %vm261, %v258, %v259
        %v264 = vsel %vm261, %v257, %v258
        %v265 = vsel %vm261, %v256, %v257
        %v266 = vsel %vm261, %v255, %v256
        %v267 = vsel %vm261, %v254, %v255
        %v268 = vsel %vm261, %v253, %v254
        %v269 = vsel %vm261, %v260, %v253
        %vm270 = vcmp.ge.s32.totalorder %v186, 1
        %vm271 = vcmp.ge.s32.totalorder %v187, 1
        %vm272 = vcmp.ge.s32.totalorder %v188, 1
        %vm273 = vcmp.ge.s32.totalorder %v189, 1
        %vm274 = vcmp.ge.s32.totalorder %v190, 1
        %vm275 = vcmp.ge.s32.totalorder %v191, 1
        %vm276 = vcmp.ge.s32.totalorder %v192, 1
        %vm277 = vcmp.ge.s32.totalorder %v193, 1
        %v278 = vsel %vm270, %v269, 0.0
        %v279 = vsel %vm271, %v268, 0.0
        %v280 = vsel %vm272, %v267, 0.0
        %v281 = vsel %vm273, %v266, 0.0
        %v282 = vsel %vm274, %v265, 0.0
        %v283 = vsel %vm275, %v264, 0.0
        %v284 = vsel %vm276, %v263, 0.0
        %v285 = vsel %vm277, %v262, 0.0
        %v286 = vld [vmem:[#allocation2] sm:$0xf]
        %v287 = vld [vmem:[#allocation2 + $0x4] sm:$0xf]
        %v288 = vld [vmem:[#allocation2 + $0x8] sm:$0xf]
        %v289 = vld [vmem:[#allocation2 + $0xc] sm:$0xf]
        %v290 = vld [vmem:[#allocation2 + $0x10] sm:$0xf]
        %v291 = vld [vmem:[#allocation2 + $0x14] sm:$0xf]
        %v292 = vld [vmem:[#allocation2 + $0x18] sm:$0xf]
        %v293 = vld [vmem:[#allocation2 + $0x1c] sm:$0xf]
        %v294 = vld [vmem:[#allocation2 + $0x20] sm:$0xf]
        %v295 = vld [vmem:[#allocation2 + $0x24] sm:$0xf]
        %v296 = vld [vmem:[#allocation2 + $0x28] sm:$0xf]
        %v297 = vld [vmem:[#allocation2 + $0x2c] sm:$0xf]
        %v298 = vld [vmem:[#allocation2 + $0x30] sm:$0xf]
        %v299 = vld [vmem:[#allocation2 + $0x34] sm:$0xf]
        %v300 = vld [vmem:[#allocation2 + $0x38] sm:$0xf]
        %v301 = vld [vmem:[#allocation2 + $0x3c] sm:$0xf]
        %v302 = vld [vmem:[#allocation2 + $0x40] sm:$0xf]
        %v303 = vld [vmem:[#allocation2 + $0x44] sm:$0xf]
        %v304 = vld [vmem:[#allocation2 + $0x48] sm:$0xf]
        %v305 = vld [vmem:[#allocation2 + $0x4c] sm:$0xf]
        %v306 = vld [vmem:[#allocation2 + $0x50] sm:$0xf]
        %v307 = vld [vmem:[#allocation2 + $0x54] sm:$0xf]
        %v308 = vld [vmem:[#allocation2 + $0x58] sm:$0xf]
        %v309 = vld [vmem:[#allocation2 + $0x5c] sm:$0xf]
        %v310 = vld [vmem:[#allocation2 + $0x60] sm:$0xf]
        %v311 = vld [vmem:[#allocation2 + $0x64] sm:$0xf]
        %v312 = vld [vmem:[#allocation2 + $0x68] sm:$0xf]
        %v313 = vld [vmem:[#allocation2 + $0x6c] sm:$0xf]
        %v314 = vld [vmem:[#allocation2 + $0x70] sm:$0xf]
        %v315 = vld [vmem:[#allocation2 + $0x74] sm:$0xf]
        %v316 = vld [vmem:[#allocation2 + $0x78] sm:$0xf]
        %v317 = vld [vmem:[#allocation2 + $0x7c] sm:$0xf]
        %v318 = vpack.c.bf16 %v279, %v278
        %v319 = vpack.c.bf16 %v246, %v245
        %v320 = vpack.c.bf16 %v281, %v280
        %v321 = vpack.c.bf16 %v248, %v247
        %v322 = vpack.c.bf16 %v283, %v282
        %v323 = vpack.c.bf16 %v250, %v249
        %v324 = vpack.c.bf16 %v285, %v284
        %v325 = vpack.c.bf16 %v252, %v251
        %v326 = vld [vmem:[%s2] sm:$0x1]
        %v327 = vlaneseq
        %v328 = vshrl.u32 %v327, 7
        %v329 = vsub.s32 0, %v328
        %v330 = vrot.slane %v326, %v329
        %v363 = vunpack.c.l.b16 %v286
        %v364 = vunpack.c.l.b16 %v287
        %v365 = vunpack.c.l.b16 %v288
        %v366 = vunpack.c.l.b16 %v289
        %v367 = vunpack.c.l.b16 %v290
        %v368 = vunpack.c.l.b16 %v291
        %v369 = vunpack.c.l.b16 %v292
        %v370 = vunpack.c.l.b16 %v293
        %v371 = vunpack.c.l.b16 %v294
        %v372 = vunpack.c.l.b16 %v295
        %v373 = vunpack.c.l.b16 %v296
        %v374 = vunpack.c.l.b16 %v297
        %v375 = vunpack.c.l.b16 %v298
        %v376 = vunpack.c.l.b16 %v299
        %v377 = vunpack.c.l.b16 %v300
        %v378 = vunpack.c.l.b16 %v301
        %v379 = vunpack.c.l.b16 %v302
        %v380 = vunpack.c.l.b16 %v303
        %v381 = vunpack.c.l.b16 %v304
        %v382 = vunpack.c.l.b16 %v305
        %v383 = vunpack.c.l.b16 %v306
        %v384 = vunpack.c.l.b16 %v307
        %v385 = vunpack.c.l.b16 %v308
        %v386 = vunpack.c.l.b16 %v309
        %v387 = vunpack.c.l.b16 %v310
        %v388 = vunpack.c.l.b16 %v311
        %v389 = vunpack.c.l.b16 %v312
        %v390 = vunpack.c.l.b16 %v313
        %v391 = vunpack.c.l.b16 %v314
        %v392 = vunpack.c.l.b16 %v315
        %v393 = vunpack.c.l.b16 %v316
        %v394 = vunpack.c.l.b16 %v317
        %v395 = vpack.c.b16 %v364, %v363
        %v396 = vpack.c.b16 %v366, %v365
        %v397 = vpack.c.b16 %v368, %v367
        %v398 = vpack.c.b16 %v370, %v369
        %v399 = vpack.c.b16 %v372, %v371
        %v400 = vpack.c.b16 %v374, %v373
        %v401 = vpack.c.b16 %v376, %v375
        %v402 = vpack.c.b16 %v378, %v377
        %v403 = vpack.c.b16 %v380, %v379
        %v404 = vpack.c.b16 %v382, %v381
        %v405 = vpack.c.b16 %v384, %v383
        %v406 = vpack.c.b16 %v386, %v385
        %v407 = vpack.c.b16 %v388, %v387
        %v408 = vpack.c.b16 %v390, %v389
        %v409 = vpack.c.b16 %v392, %v391
        %v410 = vpack.c.b16 %v394, %v393
        %427 = vmatprep.subr.bf16.mxu0 0
        %428 = vmatpush1.bf16.msra.mxu0 %v395
        %429 = vmatprep.subr.bf16.mxu0 0
        %430 = vmatpush1.bf16.msra.mxu0 %v396
        %431 = vmatprep.subr.bf16.mxu0 0
        %432 = vmatpush1.bf16.msra.mxu0 %v397
        %433 = vmatprep.subr.bf16.mxu0 0
        %434 = vmatpush1.bf16.msra.mxu0 %v398
        %435 = vmatprep.subr.bf16.mxu0 0
        %436 = vmatpush1.bf16.msra.mxu0 %v399
        %437 = vmatprep.subr.bf16.mxu0 0
        %438 = vmatpush1.bf16.msra.mxu0 %v400
        %439 = vmatprep.subr.bf16.mxu0 0
        %440 = vmatpush1.bf16.msra.mxu0 %v401
        %441 = vmatprep.subr.bf16.mxu0 0
        %442 = vmatpush1.bf16.msra.mxu0 %v402
        %443 = vmatprep.subr.bf16.mxu0 0
        %444 = vmatpush1.bf16.msra.mxu0 %v403
        %445 = vmatprep.subr.bf16.mxu0 0
        %446 = vmatpush1.bf16.msra.mxu0 %v404
        %447 = vmatprep.subr.bf16.mxu0 0
        %448 = vmatpush1.bf16.msra.mxu0 %v405
        %449 = vmatprep.subr.bf16.mxu0 0
        %450 = vmatpush1.bf16.msra.mxu0 %v406
        %451 = vmatprep.subr.bf16.mxu0 0
        %452 = vmatpush1.bf16.msra.mxu0 %v407
        %453 = vmatprep.subr.bf16.mxu0 0
        %454 = vmatpush1.bf16.msra.mxu0 %v408
        %455 = vmatprep.subr.bf16.mxu0 0
        %456 = vmatpush1.bf16.msra.mxu0 %v409
        %457 = vmatprep.subr.bf16.mxu0 0
        %458 = vmatpush1.bf16.msra.mxu0 %v410
        %459 = vmatprep.mubr.bf16.mxu0 %v319
        %460 = vmatmul.mubr.bf16.gmra.mrb[0].mxu0 %v318
        %v461 = vpop.f32.mrb[0].mxu0
        %v462 = vadd.f32 %v330, %v461
        %v463 = vpop.f32.mrb[0].mxu0
        %v464 = vpop.f32.mrb[0].mxu0
        %v465 = vadd.f32 %v330, %v464
        %v466 = vpop.f32.mrb[0].mxu0
        %467 = vmatprep.mubr.bf16.mxu0 %v321
        %468 = vmatmul.mubr.bf16.gmra.mrb[0].mxu0 %v320
        %v469 = vpop.f32.mrb[0].mxu0
        %v470 = vadd.f32 %v330, %v469
        %v471 = vpop.f32.mrb[0].mxu0
        %v472 = vpop.f32.mrb[0].mxu0
        %v473 = vadd.f32 %v330, %v472
        %v474 = vpop.f32.mrb[0].mxu0
        %475 = vmatprep.mubr.bf16.mxu0 %v323
        %476 = vmatmul.mubr.bf16.gmra.mrb[0].mxu0 %v322
        %v477 = vpop.f32.mrb[0].mxu0
        %v478 = vadd.f32 %v330, %v477
        %v479 = vpop.f32.mrb[0].mxu0
        %v480 = vpop.f32.mrb[0].mxu0
        %v481 = vadd.f32 %v330, %v480
        %v482 = vpop.f32.mrb[0].mxu0
        %483 = vmatprep.mubr.bf16.mxu0 %v325
        %484 = vmatmul.mubr.bf16.gmra.mrb[0].mxu0 %v324
        %v485 = vpop.f32.mrb[0].mxu0
        %v486 = vadd.f32 %v330, %v485
        %v487 = vpop.f32.mrb[0].mxu0
        %v488 = vpop.f32.mrb[0].mxu0
        %v489 = vadd.f32 %v330, %v488
        %v490 = vpop.f32.mrb[0].mxu0
        %491 = vdwg.mxu0
        %v492 = vmax.f32 %v462, 0.0
        %v493 = vmax.f32 %v465, 0.0
        %v494 = vmax.f32 %v470, 0.0
        %v495 = vmax.f32 %v473, 0.0
        %v496 = vmax.f32 %v478, 0.0
        %v497 = vmax.f32 %v481, 0.0
        %v498 = vmax.f32 %v486, 0.0
        %v499 = vmax.f32 %v489, 0.0
        %v500 = vrot.slane %v492, 7
        %v501 = vrot.slane %v493, 7
        %v502 = vrot.slane %v494, 7
        %v503 = vrot.slane %v495, 7
        %v504 = vrot.slane %v496, 7
        %v505 = vrot.slane %v497, 7
        %v506 = vrot.slane %v498, 7
        %v507 = vrot.slane %v499, 7
        %v508 = vsel %vm261, %v506, %v507
        %v509 = vsel %vm261, %v505, %v506
        %v510 = vsel %vm261, %v504, %v505
        %v511 = vsel %vm261, %v503, %v504
        %v512 = vsel %vm261, %v502, %v503
        %v513 = vsel %vm261, %v501, %v502
        %v514 = vsel %vm261, %v500, %v501
        %v515 = vsel %vm261, %v507, %v500
        %v516 = vsel %vm270, %v515, 0.0
        %v517 = vsel %vm271, %v514, 0.0
        %v518 = vsel %vm272, %v513, 0.0
        %v519 = vsel %vm273, %v512, 0.0
        %v520 = vsel %vm274, %v511, 0.0
        %v521 = vsel %vm275, %v510, 0.0
        %v522 = vsel %vm276, %v509, 0.0
        %v523 = vsel %vm277, %v508, 0.0
        %v524 = vld [vmem:[#allocation2 + $0x80] sm:$0xf]
        %v525 = vld [vmem:[#allocation2 + $0x84] sm:$0xf]
        %v526 = vld [vmem:[#allocation2 + $0x88] sm:$0xf]
        %v527 = vld [vmem:[#allocation2 + $0x8c] sm:$0xf]
        %v528 = vld [vmem:[#allocation2 + $0x90] sm:$0xf]
        %v529 = vld [vmem:[#allocation2 + $0x94] sm:$0xf]
        %v530 = vld [vmem:[#allocation2 + $0x98] sm:$0xf]
        %v531 = vld [vmem:[#allocation2 + $0x9c] sm:$0xf]
        %v532 = vld [vmem:[#allocation2 + $0xa0] sm:$0xf]
        %v533 = vld [vmem:[#allocation2 + $0xa4] sm:$0xf]
        %v534 = vld [vmem:[#allocation2 + $0xa8] sm:$0xf]
        %v535 = vld [vmem:[#allocation2 + $0xac] sm:$0xf]
        %v536 = vld [vmem:[#allocation2 + $0xb0] sm:$0xf]
        %v537 = vld [vmem:[#allocation2 + $0xb4] sm:$0xf]
        %v538 = vld [vmem:[#allocation2 + $0xb8] sm:$0xf]
        %v539 = vld [vmem:[#allocation2 + $0xbc] sm:$0xf]
        %v540 = vld [vmem:[#allocation2 + $0xc0] sm:$0xf]
        %v541 = vld [vmem:[#allocation2 + $0xc4] sm:$0xf]
        %v542 = vld [vmem:[#allocation2 + $0xc8] sm:$0xf]
        %v543 = vld [vmem:[#allocation2 + $0xcc] sm:$0xf]
        %v544 = vld [vmem:[#allocation2 + $0xd0] sm:$0xf]
        %v545 = vld [vmem:[#allocation2 + $0xd4] sm:$0xf]
        %v546 = vld [vmem:[#allocation2 + $0xd8] sm:$0xf]
        %v547 = vld [vmem:[#allocation2 + $0xdc] sm:$0xf]
        %v548 = vld [vmem:[#allocation2 + $0xe0] sm:$0xf]
        %v549 = vld [vmem:[#allocation2 + $0xe4] sm:$0xf]
        %v550 = vld [vmem:[#allocation2 + $0xe8] sm:$0xf]
        %v551 = vld [vmem:[#allocation2 + $0xec] sm:$0xf]
        %v552 = vld [vmem:[#allocation2 + $0xf0] sm:$0xf]
        %v553 = vld [vmem:[#allocation2 + $0xf4] sm:$0xf]
        %v554 = vld [vmem:[#allocation2 + $0xf8] sm:$0xf]
        %v555 = vld [vmem:[#allocation2 + $0xfc] sm:$0xf]
        %v556 = vpack.c.bf16 %v517, %v516
        %v557 = vpack.c.bf16 %v493, %v492
        %v558 = vpack.c.bf16 %v519, %v518
        %v559 = vpack.c.bf16 %v495, %v494
        %v560 = vpack.c.bf16 %v521, %v520
        %v561 = vpack.c.bf16 %v497, %v496
        %v562 = vpack.c.bf16 %v523, %v522
        %v563 = vpack.c.bf16 %v499, %v498
        %v564 = vld [vmem:[%s2 + $0x1] sm:$0x1]
        %v565 = vlaneseq
        %v566 = vshrl.u32 %v565, 7
        %v567 = vsub.s32 0, %v566
        %v568 = vrot.slane %v564, %v567
        %v601 = vunpack.c.l.b16 %v524
        %v602 = vunpack.c.l.b16 %v525
        %v603 = vunpack.c.l.b16 %v526
        %v604 = vunpack.c.l.b16 %v527
        %v605 = vunpack.c.l.b16 %v528
        %v606 = vunpack.c.l.b16 %v529
        %v607 = vunpack.c.l.b16 %v530
        %v608 = vunpack.c.l.b16 %v531
        %v609 = vunpack.c.l.b16 %v532
        %v610 = vunpack.c.l.b16 %v533
        %v611 = vunpack.c.l.b16 %v534
        %v612 = vunpack.c.l.b16 %v535
        %v613 = vunpack.c.l.b16 %v536
        %v614 = vunpack.c.l.b16 %v537
        %v615 = vunpack.c.l.b16 %v538
        %v616 = vunpack.c.l.b16 %v539
        %v617 = vunpack.c.l.b16 %v540
        %v618 = vunpack.c.l.b16 %v541
        %v619 = vunpack.c.l.b16 %v542
        %v620 = vunpack.c.l.b16 %v543
        %v621 = vunpack.c.l.b16 %v544
        %v622 = vunpack.c.l.b16 %v545
        %v623 = vunpack.c.l.b16 %v546
        %v624 = vunpack.c.l.b16 %v547
        %v625 = vunpack.c.l.b16 %v548
        %v626 = vunpack.c.l.b16 %v549
        %v627 = vunpack.c.l.b16 %v550
        %v628 = vunpack.c.l.b16 %v551
        %v629 = vunpack.c.l.b16 %v552
        %v630 = vunpack.c.l.b16 %v553
        %v631 = vunpack.c.l.b16 %v554
        %v632 = vunpack.c.l.b16 %v555
        %v633 = vpack.c.b16 %v602, %v601
        %v634 = vpack.c.b16 %v604, %v603
        %v635 = vpack.c.b16 %v606, %v605
        %v636 = vpack.c.b16 %v608, %v607
        %v637 = vpack.c.b16 %v610, %v609
        %v638 = vpack.c.b16 %v612, %v611
        %v639 = vpack.c.b16 %v614, %v613
        %v640 = vpack.c.b16 %v616, %v615
        %v641 = vpack.c.b16 %v618, %v617
        %v642 = vpack.c.b16 %v620, %v619
        %v643 = vpack.c.b16 %v622, %v621
        %v644 = vpack.c.b16 %v624, %v623
        %v645 = vpack.c.b16 %v626, %v625
        %v646 = vpack.c.b16 %v628, %v627
        %v647 = vpack.c.b16 %v630, %v629
        %v648 = vpack.c.b16 %v632, %v631
        %665 = vmatprep.subr.bf16.mxu0 0
        %666 = vmatpush1.bf16.msra.mxu0 %v633
        %667 = vmatprep.subr.bf16.mxu0 0
        %668 = vmatpush1.bf16.msra.mxu0 %v634
        %669 = vmatprep.subr.bf16.mxu0 0
        %670 = vmatpush1.bf16.msra.mxu0 %v635
        %671 = vmatprep.subr.bf16.mxu0 0
        %672 = vmatpush1.bf16.msra.mxu0 %v636
        %673 = vmatprep.subr.bf16.mxu0 0
        %674 = vmatpush1.bf16.msra.mxu0 %v637
        %675 = vmatprep.subr.bf16.mxu0 0
        %676 = vmatpush1.bf16.msra.mxu0 %v638
        %677 = vmatprep.subr.bf16.mxu0 0
        %678 = vmatpush1.bf16.msra.mxu0 %v639
        %679 = vmatprep.subr.bf16.mxu0 0
        %680 = vmatpush1.bf16.msra.mxu0 %v640
        %681 = vmatprep.subr.bf16.mxu0 0
        %682 = vmatpush1.bf16.msra.mxu0 %v641
        %683 = vmatprep.subr.bf16.mxu0 0
        %684 = vmatpush1.bf16.msra.mxu0 %v642
        %685 = vmatprep.subr.bf16.mxu0 0
        %686 = vmatpush1.bf16.msra.mxu0 %v643
        %687 = vmatprep.subr.bf16.mxu0 0
        %688 = vmatpush1.bf16.msra.mxu0 %v644
        %689 = vmatprep.subr.bf16.mxu0 0
        %690 = vmatpush1.bf16.msra.mxu0 %v645
        %691 = vmatprep.subr.bf16.mxu0 0
        %692 = vmatpush1.bf16.msra.mxu0 %v646
        %693 = vmatprep.subr.bf16.mxu0 0
        %694 = vmatpush1.bf16.msra.mxu0 %v647
        %695 = vmatprep.subr.bf16.mxu0 0
        %696 = vmatpush1.bf16.msra.mxu0 %v648
        %697 = vmatprep.mubr.bf16.mxu0 %v557
        %698 = vmatmul.mubr.bf16.gmra.mrb[0].mxu0 %v556
        %v699 = vpop.f32.mrb[0].mxu0
        %v700 = vadd.f32 %v568, %v699
        %v701 = vpop.f32.mrb[0].mxu0
        %v702 = vpop.f32.mrb[0].mxu0
        %v703 = vadd.f32 %v568, %v702
        %v704 = vpop.f32.mrb[0].mxu0
        %705 = vmatprep.mubr.bf16.mxu0 %v559
        %706 = vmatmul.mubr.bf16.gmra.mrb[0].mxu0 %v558
        %v707 = vpop.f32.mrb[0].mxu0
        %v708 = vadd.f32 %v568, %v707
        %v709 = vpop.f32.mrb[0].mxu0
        %v710 = vpop.f32.mrb[0].mxu0
        %v711 = vadd.f32 %v568, %v710
        %v712 = vpop.f32.mrb[0].mxu0
        %713 = vmatprep.mubr.bf16.mxu0 %v561
        %714 = vmatmul.mubr.bf16.gmra.mrb[0].mxu0 %v560
        %v715 = vpop.f32.mrb[0].mxu0
        %v716 = vadd.f32 %v568, %v715
        %v717 = vpop.f32.mrb[0].mxu0
        %v718 = vpop.f32.mrb[0].mxu0
        %v719 = vadd.f32 %v568, %v718
        %v720 = vpop.f32.mrb[0].mxu0
        %721 = vmatprep.mubr.bf16.mxu0 %v563
        %722 = vmatmul.mubr.bf16.gmra.mrb[0].mxu0 %v562
        %v723 = vpop.f32.mrb[0].mxu0
        %v724 = vadd.f32 %v568, %v723
        %v725 = vpop.f32.mrb[0].mxu0
        %v726 = vpop.f32.mrb[0].mxu0
        %v727 = vadd.f32 %v568, %v726
        %v728 = vpop.f32.mrb[0].mxu0
        %729 = vdwg.mxu0
        %v730 = vmax.f32 %v700, 0.0
        %v731 = vmax.f32 %v703, 0.0
        %v732 = vmax.f32 %v708, 0.0
        %v733 = vmax.f32 %v711, 0.0
        %v734 = vmax.f32 %v716, 0.0
        %v735 = vmax.f32 %v719, 0.0
        %v736 = vmax.f32 %v724, 0.0
        %v737 = vmax.f32 %v727, 0.0
        %v738 = vld [vmem:[#allocation2 + $0x100] sm:$0xf]
        %v739 = vld [vmem:[#allocation2 + $0x104] sm:$0xf]
        %v740 = vld [vmem:[#allocation2 + $0x108] sm:$0xf]
        %v741 = vld [vmem:[#allocation2 + $0x10c] sm:$0xf]
        %v742 = vld [vmem:[#allocation2 + $0x110] sm:$0xf]
        %v743 = vld [vmem:[#allocation2 + $0x114] sm:$0xf]
        %v744 = vld [vmem:[#allocation2 + $0x118] sm:$0xf]
        %v745 = vld [vmem:[#allocation2 + $0x11c] sm:$0xf]
        %v746 = vld [vmem:[#allocation2 + $0x120] sm:$0xf]
        %v747 = vld [vmem:[#allocation2 + $0x124] sm:$0xf]
        %v748 = vld [vmem:[#allocation2 + $0x128] sm:$0xf]
        %v749 = vld [vmem:[#allocation2 + $0x12c] sm:$0xf]
        %v750 = vld [vmem:[#allocation2 + $0x130] sm:$0xf]
        %v751 = vld [vmem:[#allocation2 + $0x134] sm:$0xf]
        %v752 = vld [vmem:[#allocation2 + $0x138] sm:$0xf]
        %v753 = vld [vmem:[#allocation2 + $0x13c] sm:$0xf]
        %v754 = vld [vmem:[%s2 + $0x2] sm:$0x1]
        %v755 = vlaneseq
        %v756 = vshrl.u32 %v755, 7
        %v757 = vsub.s32 0, %v756
        %v758 = vrot.slane %v754, %v757
        %v775 = vunpack.c.l.b16 %v738
        %v776 = vunpack.c.l.b16 %v739
        %v777 = vunpack.c.l.b16 %v740
        %v778 = vunpack.c.l.b16 %v741
        %v779 = vunpack.c.l.b16 %v742
        %v780 = vunpack.c.l.b16 %v743
        %v781 = vunpack.c.l.b16 %v744
        %v782 = vunpack.c.l.b16 %v745
        %v783 = vunpack.c.l.b16 %v746
        %v784 = vunpack.c.l.b16 %v747
        %v785 = vunpack.c.l.b16 %v748
        %v786 = vunpack.c.l.b16 %v749
        %v787 = vunpack.c.l.b16 %v750
        %v788 = vunpack.c.l.b16 %v751
        %v789 = vunpack.c.l.b16 %v752
        %v790 = vunpack.c.l.b16 %v753
        %v791 = vpack.c.b16 %v776, %v775
        %v792 = vpack.c.b16 %v778, %v777
        %v793 = vpack.c.b16 %v780, %v779
        %v794 = vpack.c.b16 %v782, %v781
        %v795 = vpack.c.b16 %v784, %v783
        %v796 = vpack.c.b16 %v786, %v785
        %v797 = vpack.c.b16 %v788, %v787
        %v798 = vpack.c.b16 %v790, %v789
        %807 = vmatprep.subr.bf16.mxu0 0
        %808 = vmatpush1.bf16.msra.mxu0 %v791
        %809 = vmatprep.subr.bf16.mxu0 0
        %810 = vmatpush1.bf16.msra.mxu0 %v792
        %811 = vmatprep.subr.bf16.mxu0 0
        %812 = vmatpush1.bf16.msra.mxu0 %v793
        %813 = vmatprep.subr.bf16.mxu0 0
        %814 = vmatpush1.bf16.msra.mxu0 %v794
        %815 = vmatprep.subr.bf16.mxu0 0
        %816 = vmatpush1.bf16.msra.mxu0 %v795
        %817 = vmatprep.subr.bf16.mxu0 0
        %818 = vmatpush1.bf16.msra.mxu0 %v796
        %819 = vmatprep.subr.bf16.mxu0 0
        %820 = vmatpush1.bf16.msra.mxu0 %v797
        %821 = vmatprep.subr.bf16.mxu0 0
        %822 = vmatpush1.bf16.msra.mxu0 %v798
        %823 = vmatprep.subr.bf16.mxu0 0
        %824 = vmatpush1.bf16.msra.mxu0 0
        %825 = vmatprep.subr.bf16.mxu0 0
        %826 = vmatpush1.bf16.msra.mxu0 0
        %827 = vmatprep.subr.bf16.mxu0 0
        %828 = vmatpush1.bf16.msra.mxu0 0
        %829 = vmatprep.subr.bf16.mxu0 0
        %830 = vmatpush1.bf16.msra.mxu0 0
        %831 = vmatprep.subr.bf16.mxu0 0
        %832 = vmatpush1.bf16.msra.mxu0 0
        %833 = vmatprep.subr.bf16.mxu0 0
        %834 = vmatpush1.bf16.msra.mxu0 0
        %835 = vmatprep.subr.bf16.mxu0 0
        %836 = vmatpush1.bf16.msra.mxu0 0
        %837 = vmatprep.subr.bf16.mxu0 0
        %838 = vmatpush1.bf16.msra.mxu0 0
        %839 = vmatprep.mubr.bf16.mxu0 0
        %840 = vmatmul.mubr.bf16.gmra.mrb[0].mxu0 %v319
        %v841 = vpop.f32.mrb[0].mxu0
        %v842 = vadd.f32 %v758, %v841
        %v843 = vpop.f32.mrb[0].mxu0
        %v844 = vpop.f32.mrb[0].mxu0
        %v845 = vadd.f32 %v758, %v844
        %v846 = vpop.f32.mrb[0].mxu0
        %847 = vmatprep.mubr.bf16.mxu0 0
        %848 = vmatmul.mubr.bf16.gmra.mrb[0].mxu0 %v321
        %v849 = vpop.f32.mrb[0].mxu0
        %v850 = vadd.f32 %v758, %v849
        %v851 = vpop.f32.mrb[0].mxu0
        %v852 = vpop.f32.mrb[0].mxu0
        %v853 = vadd.f32 %v758, %v852
        %v854 = vpop.f32.mrb[0].mxu0
        %855 = vmatprep.mubr.bf16.mxu0 0
        %856 = vmatmul.mubr.bf16.gmra.mrb[0].mxu0 %v323
        %v857 = vpop.f32.mrb[0].mxu0
        %v858 = vadd.f32 %v758, %v857
        %v859 = vpop.f32.mrb[0].mxu0
        %v860 = vpop.f32.mrb[0].mxu0
        %v861 = vadd.f32 %v758, %v860
        %v862 = vpop.f32.mrb[0].mxu0
        %863 = vmatprep.mubr.bf16.mxu0 0
        %864 = vmatmul.mubr.bf16.gmra.mrb[0].mxu0 %v325
        %v865 = vpop.f32.mrb[0].mxu0
        %v866 = vadd.f32 %v758, %v865
        %v867 = vpop.f32.mrb[0].mxu0
        %v868 = vpop.f32.mrb[0].mxu0
        %v869 = vadd.f32 %v758, %v868
        %v870 = vpop.f32.mrb[0].mxu0
        %871 = vdwg.mxu0
        %v872 = vadd.f32 %v730, %v842
        %v873 = vadd.f32 %v731, %v845
        %v874 = vadd.f32 %v732, %v850
        %v875 = vadd.f32 %v733, %v853
        %v876 = vadd.f32 %v734, %v858
        %v877 = vadd.f32 %v735, %v861
        %v878 = vadd.f32 %v736, %v866
        %v879 = vadd.f32 %v737, %v869
        %v880 = vmax.f32 %v872, 0.0
        %v881 = vmax.f32 %v873, 0.0
        %v882 = vmax.f32 %v874, 0.0
        %v883 = vmax.f32 %v875, 0.0
        %v884 = vmax.f32 %v876, 0.0
        %v885 = vmax.f32 %v877, 0.0
        %v886 = vmax.f32 %v878, 0.0
        %v887 = vmax.f32 %v879, 0.0
        %v888 = vrot.slane %v880, 6
        %v889 = vrot.slane %v881, 6
        %v890 = vrot.slane %v882, 6
        %v891 = vrot.slane %v883, 6
        %v892 = vrot.slane %v884, 6
        %v893 = vrot.slane %v885, 6
        %v894 = vrot.slane %v886, 6
        %v895 = vrot.slane %v887, 6
        %vm896 = vcmp.lt.s32.totalorder %v186, 2
        %v897 = vsel %vm896, %v894, %v895
        %v898 = vsel %vm896, %v893, %v894
        %v899 = vsel %vm896, %v892, %v893
        %v900 = vsel %vm896, %v891, %v892
        %v901 = vsel %vm896, %v890, %v891
        %v902 = vsel %vm896, %v889, %v890
        %v903 = vsel %vm896, %v888, %v889
        %v904 = vsel %vm896, %v895, %v888
        %vm905 = vcmp.ge.s32.totalorder %v186, 2
        %vm906 = vcmp.ge.s32.totalorder %v187, 2
        %vm907 = vcmp.ge.s32.totalorder %v188, 2
        %vm908 = vcmp.ge.s32.totalorder %v189, 2
        %vm909 = vcmp.ge.s32.totalorder %v190, 2
        %vm910 = vcmp.ge.s32.totalorder %v191, 2
        %vm911 = vcmp.ge.s32.totalorder %v192, 2
        %vm912 = vcmp.ge.s32.totalorder %v193, 2
        %v913 = vsel %vm905, %v904, 0.0
        %v914 = vsel %vm906, %v903, 0.0
        %v915 = vsel %vm907, %v902, 0.0
        %v916 = vsel %vm908, %v901, 0.0
        %v917 = vsel %vm909, %v900, 0.0
        %v918 = vsel %vm910, %v899, 0.0
        %v919 = vsel %vm911, %v898, 0.0
        %v920 = vsel %vm912, %v897, 0.0
        %v921 = vld [vmem:[#allocation2 + $0x140] sm:$0xf]
        %v922 = vld [vmem:[#allocation2 + $0x144] sm:$0xf]
        %v923 = vld [vmem:[#allocation2 + $0x148] sm:$0xf]
        %v924 = vld [vmem:[#allocation2 + $0x14c] sm:$0xf]
        %v925 = vld [vmem:[#allocation2 + $0x150] sm:$0xf]
        %v926 = vld [vmem:[#allocation2 + $0x154] sm:$0xf]
        %v927 = vld [vmem:[#allocation2 + $0x158] sm:$0xf]
        %v928 = vld [vmem:[#allocation2 + $0x15c] sm:$0xf]
        %v929 = vld [vmem:[#allocation2 + $0x160] sm:$0xf]
        %v930 = vld [vmem:[#allocation2 + $0x164] sm:$0xf]
        %v931 = vld [vmem:[#allocation2 + $0x168] sm:$0xf]
        %v932 = vld [vmem:[#allocation2 + $0x16c] sm:$0xf]
        %v933 = vld [vmem:[#allocation2 + $0x170] sm:$0xf]
        %v934 = vld [vmem:[#allocation2 + $0x174] sm:$0xf]
        %v935 = vld [vmem:[#allocation2 + $0x178] sm:$0xf]
        %v936 = vld [vmem:[#allocation2 + $0x17c] sm:$0xf]
        %v937 = vld [vmem:[#allocation2 + $0x180] sm:$0xf]
        %v938 = vld [vmem:[#allocation2 + $0x184] sm:$0xf]
        %v939 = vld [vmem:[#allocation2 + $0x188] sm:$0xf]
        %v940 = vld [vmem:[#allocation2 + $0x18c] sm:$0xf]
        %v941 = vld [vmem:[#allocation2 + $0x190] sm:$0xf]
        %v942 = vld [vmem:[#allocation2 + $0x194] sm:$0xf]
        %v943 = vld [vmem:[#allocation2 + $0x198] sm:$0xf]
        %v944 = vld [vmem:[#allocation2 + $0x19c] sm:$0xf]
        %v945 = vld [vmem:[#allocation2 + $0x1a0] sm:$0xf]
        %v946 = vld [vmem:[#allocation2 + $0x1a4] sm:$0xf]
        %v947 = vld [vmem:[#allocation2 + $0x1a8] sm:$0xf]
        %v948 = vld [vmem:[#allocation2 + $0x1ac] sm:$0xf]
        %v949 = vld [vmem:[#allocation2 + $0x1b0] sm:$0xf]
        %v950 = vld [vmem:[#allocation2 + $0x1b4] sm:$0xf]
        %v951 = vld [vmem:[#allocation2 + $0x1b8] sm:$0xf]
        %v952 = vld [vmem:[#allocation2 + $0x1bc] sm:$0xf]
        %v953 = vpack.c.bf16 %v914, %v913
        %v954 = vpack.c.bf16 %v881, %v880
        %v955 = vpack.c.bf16 %v916, %v915
        %v956 = vpack.c.bf16 %v883, %v882
        %v957 = vpack.c.bf16 %v918, %v917
        %v958 = vpack.c.bf16 %v885, %v884
        %v959 = vpack.c.bf16 %v920, %v919
        %v960 = vpack.c.bf16 %v887, %v886
        %v961 = vld [vmem:[%s2 + $0x3] sm:$0x1]
        %v962 = vlaneseq
        %v963 = vshrl.u32 %v962, 7
        %v964 = vsub.s32 0, %v963
        %v965 = vrot.slane %v961, %v964
        %v998 = vunpack.c.l.b16 %v921
        %v999 = vunpack.c.l.b16 %v922
        %v1000 = vunpack.c.l.b16 %v923
        %v1001 = vunpack.c.l.b16 %v924
        %v1002 = vunpack.c.l.b16 %v925
        %v1003 = vunpack.c.l.b16 %v926
        %v1004 = vunpack.c.l.b16 %v927
        %v1005 = vunpack.c.l.b16 %v928
        %v1006 = vunpack.c.l.b16 %v929
        %v1007 = vunpack.c.l.b16 %v930
        %v1008 = vunpack.c.l.b16 %v931
        %v1009 = vunpack.c.l.b16 %v932
        %v1010 = vunpack.c.l.b16 %v933
        %v1011 = vunpack.c.l.b16 %v934
        %v1012 = vunpack.c.l.b16 %v935
        %v1013 = vunpack.c.l.b16 %v936
        %v1014 = vunpack.c.l.b16 %v937
        %v1015 = vunpack.c.l.b16 %v938
        %v1016 = vunpack.c.l.b16 %v939
        %v1017 = vunpack.c.l.b16 %v940
        %v1018 = vunpack.c.l.b16 %v941
        %v1019 = vunpack.c.l.b16 %v942
        %v1020 = vunpack.c.l.b16 %v943
        %v1021 = vunpack.c.l.b16 %v944
        %v1022 = vunpack.c.l.b16 %v945
        %v1023 = vunpack.c.l.b16 %v946
        %v1024 = vunpack.c.l.b16 %v947
        %v1025 = vunpack.c.l.b16 %v948
        %v1026 = vunpack.c.l.b16 %v949
        %v1027 = vunpack.c.l.b16 %v950
        %v1028 = vunpack.c.l.b16 %v951
        %v1029 = vunpack.c.l.b16 %v952
        %v1030 = vpack.c.b16 %v999, %v998
        %v1031 = vpack.c.b16 %v1001, %v1000
        %v1032 = vpack.c.b16 %v1003, %v1002
        %v1033 = vpack.c.b16 %v1005, %v1004
        %v1034 = vpack.c.b16 %v1007, %v1006
        %v1035 = vpack.c.b16 %v1009, %v1008
        %v1036 = vpack.c.b16 %v1011, %v1010
        %v1037 = vpack.c.b16 %v1013, %v1012
        %v1038 = vpack.c.b16 %v1015, %v1014
        %v1039 = vpack.c.b16 %v1017, %v1016
        %v1040 = vpack.c.b16 %v1019, %v1018
        %v1041 = vpack.c.b16 %v1021, %v1020
        %v1042 = vpack.c.b16 %v1023, %v1022
        %v1043 = vpack.c.b16 %v1025, %v1024
        %v1044 = vpack.c.b16 %v1027, %v1026
        %v1045 = vpack.c.b16 %v1029, %v1028
        %1062 = vmatprep.subr.bf16.mxu0 0
        %1063 = vmatpush1.bf16.msra.mxu0 %v1030
        %1064 = vmatprep.subr.bf16.mxu0 0
        %1065 = vmatpush1.bf16.msra.mxu0 %v1031
        %1066 = vmatprep.subr.bf16.mxu0 0
        %1067 = vmatpush1.bf16.msra.mxu0 %v1032
        %1068 = vmatprep.subr.bf16.mxu0 0
        %1069 = vmatpush1.bf16.msra.mxu0 %v1033
        %1070 = vmatprep.subr.bf16.mxu0 0
        %1071 = vmatpush1.bf16.msra.mxu0 %v1034
        %1072 = vmatprep.subr.bf16.mxu0 0
        %1073 = vmatpush1.bf16.msra.mxu0 %v1035
        %1074 = vmatprep.subr.bf16.mxu0 0
        %1075 = vmatpush1.bf16.msra.mxu0 %v1036
        %1076 = vmatprep.subr.bf16.mxu0 0
        %1077 = vmatpush1.bf16.msra.mxu0 %v1037
        %1078 = vmatprep.subr.bf16.mxu0 0
        %1079 = vmatpush1.bf16.msra.mxu0 %v1038
        %1080 = vmatprep.subr.bf16.mxu0 0
        %1081 = vmatpush1.bf16.msra.mxu0 %v1039
        %1082 = vmatprep.subr.bf16.mxu0 0
        %1083 = vmatpush1.bf16.msra.mxu0 %v1040
        %1084 = vmatprep.subr.bf16.mxu0 0
        %1085 = vmatpush1.bf16.msra.mxu0 %v1041
        %1086 = vmatprep.subr.bf16.mxu0 0
        %1087 = vmatpush1.bf16.msra.mxu0 %v1042
        %1088 = vmatprep.subr.bf16.mxu0 0
        %1089 = vmatpush1.bf16.msra.mxu0 %v1043
        %1090 = vmatprep.subr.bf16.mxu0 0
        %1091 = vmatpush1.bf16.msra.mxu0 %v1044
        %1092 = vmatprep.subr.bf16.mxu0 0
        %1093 = vmatpush1.bf16.msra.mxu0 %v1045
        %1094 = vmatprep.mubr.bf16.mxu0 %v954
        %1095 = vmatmul.mubr.bf16.gmra.mrb[0].mxu0 %v953
        %v1096 = vpop.f32.mrb[0].mxu0
        %v1097 = vadd.f32 %v965, %v1096
        %v1098 = vpop.f32.mrb[0].mxu0
        %v1099 = vpop.f32.mrb[0].mxu0
        %v1100 = vadd.f32 %v965, %v1099
        %v1101 = vpop.f32.mrb[0].mxu0
        %1102 = vmatprep.mubr.bf16.mxu0 %v956
        %1103 = vmatmul.mubr.bf16.gmra.mrb[0].mxu0 %v955
        %v1104 = vpop.f32.mrb[0].mxu0
        %v1105 = vadd.f32 %v965, %v1104
        %v1106 = vpop.f32.mrb[0].mxu0
        %v1107 = vpop.f32.mrb[0].mxu0
        %v1108 = vadd.f32 %v965, %v1107
        %v1109 = vpop.f32.mrb[0].mxu0
        %1110 = vmatprep.mubr.bf16.mxu0 %v958
        %1111 = vmatmul.mubr.bf16.gmra.mrb[0].mxu0 %v957
        %v1112 = vpop.f32.mrb[0].mxu0
        %v1113 = vadd.f32 %v965, %v1112
        %v1114 = vpop.f32.mrb[0].mxu0
        %v1115 = vpop.f32.mrb[0].mxu0
        %v1116 = vadd.f32 %v965, %v1115
        %v1117 = vpop.f32.mrb[0].mxu0
        %1118 = vmatprep.mubr.bf16.mxu0 %v960
        %1119 = vmatmul.mubr.bf16.gmra.mrb[0].mxu0 %v959
        %v1120 = vpop.f32.mrb[0].mxu0
        %v1121 = vadd.f32 %v965, %v1120
        %v1122 = vpop.f32.mrb[0].mxu0
        %v1123 = vpop.f32.mrb[0].mxu0
        %v1124 = vadd.f32 %v965, %v1123
        %v1125 = vpop.f32.mrb[0].mxu0
        %1126 = vdwg.mxu0
        %v1127 = vmax.f32 %v1097, 0.0
        %v1128 = vmax.f32 %v1100, 0.0
        %v1129 = vmax.f32 %v1105, 0.0
        %v1130 = vmax.f32 %v1108, 0.0
        %v1131 = vmax.f32 %v1113, 0.0
        %v1132 = vmax.f32 %v1116, 0.0
        %v1133 = vmax.f32 %v1121, 0.0
        %v1134 = vmax.f32 %v1124, 0.0
        %v1135 = vrot.slane %v1127, 6
        %v1136 = vrot.slane %v1128, 6
        %v1137 = vrot.slane %v1129, 6
        %v1138 = vrot.slane %v1130, 6
        %v1139 = vrot.slane %v1131, 6
        %v1140 = vrot.slane %v1132, 6
        %v1141 = vrot.slane %v1133, 6
        %v1142 = vrot.slane %v1134, 6
        %v1143 = vsel %vm896, %v1141, %v1142
        %v1144 = vsel %vm896, %v1140, %v1141
        %v1145 = vsel %vm896, %v1139, %v1140
        %v1146 = vsel %vm896, %v1138, %v1139
        %v1147 = vsel %vm896, %v1137, %v1138
        %v1148 = vsel %vm896, %v1136, %v1137
        %v1149 = vsel %vm896, %v1135, %v1136
        %v1150 = vsel %vm896, %v1142, %v1135
        %v1151 = vsel %vm905, %v1150, 0.0
        %v1152 = vsel %vm906, %v1149, 0.0
        %v1153 = vsel %vm907, %v1148, 0.0
        %v1154 = vsel %vm908, %v1147, 0.0
        %v1155 = vsel %vm909, %v1146, 0.0
        %v1156 = vsel %vm910, %v1145, 0.0
        %v1157 = vsel %vm911, %v1144, 0.0
        %v1158 = vsel %vm912, %v1143, 0.0
        %v1159 = vld [vmem:[#allocation2 + $0x1c0] sm:$0xf]
        %v1160 = vld [vmem:[#allocation2 + $0x1c4] sm:$0xf]
        %v1161 = vld [vmem:[#allocation2 + $0x1c8] sm:$0xf]
        %v1162 = vld [vmem:[#allocation2 + $0x1cc] sm:$0xf]
        %v1163 = vld [vmem:[#allocation2 + $0x1d0] sm:$0xf]
        %v1164 = vld [vmem:[#allocation2 + $0x1d4] sm:$0xf]
        %v1165 = vld [vmem:[#allocation2 + $0x1d8] sm:$0xf]
        %v1166 = vld [vmem:[#allocation2 + $0x1dc] sm:$0xf]
        %v1167 = vld [vmem:[#allocation2 + $0x1e0] sm:$0xf]
        %v1168 = vld [vmem:[#allocation2 + $0x1e4] sm:$0xf]
        %v1169 = vld [vmem:[#allocation2 + $0x1e8] sm:$0xf]
        %v1170 = vld [vmem:[#allocation2 + $0x1ec] sm:$0xf]
        %v1171 = vld [vmem:[#allocation2 + $0x1f0] sm:$0xf]
        %v1172 = vld [vmem:[#allocation2 + $0x1f4] sm:$0xf]
        %v1173 = vld [vmem:[#allocation2 + $0x1f8] sm:$0xf]
        %v1174 = vld [vmem:[#allocation2 + $0x1fc] sm:$0xf]
        %v1175 = vld [vmem:[#allocation2 + $0x200] sm:$0xf]
        %v1176 = vld [vmem:[#allocation2 + $0x204] sm:$0xf]
        %v1177 = vld [vmem:[#allocation2 + $0x208] sm:$0xf]
        %v1178 = vld [vmem:[#allocation2 + $0x20c] sm:$0xf]
        %v1179 = vld [vmem:[#allocation2 + $0x210] sm:$0xf]
        %v1180 = vld [vmem:[#allocation2 + $0x214] sm:$0xf]
        %v1181 = vld [vmem:[#allocation2 + $0x218] sm:$0xf]
        %v1182 = vld [vmem:[#allocation2 + $0x21c] sm:$0xf]
        %v1183 = vld [vmem:[#allocation2 + $0x220] sm:$0xf]
        %v1184 = vld [vmem:[#allocation2 + $0x224] sm:$0xf]
        %v1185 = vld [vmem:[#allocation2 + $0x228] sm:$0xf]
        %v1186 = vld [vmem:[#allocation2 + $0x22c] sm:$0xf]
        %v1187 = vld [vmem:[#allocation2 + $0x230] sm:$0xf]
        %v1188 = vld [vmem:[#allocation2 + $0x234] sm:$0xf]
        %v1189 = vld [vmem:[#allocation2 + $0x238] sm:$0xf]
        %v1190 = vld [vmem:[#allocation2 + $0x23c] sm:$0xf]
        %v1191 = vpack.c.bf16 %v1152, %v1151
        %v1192 = vpack.c.bf16 %v1128, %v1127
        %v1193 = vpack.c.bf16 %v1154, %v1153
        %v1194 = vpack.c.bf16 %v1130, %v1129
        %v1195 = vpack.c.bf16 %v1156, %v1155
        %v1196 = vpack.c.bf16 %v1132, %v1131
        %v1197 = vpack.c.bf16 %v1158, %v1157
        %v1198 = vpack.c.bf16 %v1134, %v1133
        %v1199 = vld [vmem:[%s2 + $0x4] sm:$0x1]
        %v1200 = vlaneseq
        %v1201 = vshrl.u32 %v1200, 7
        %v1202 = vsub.s32 0, %v1201
        %v1203 = vrot.slane %v1199, %v1202
        %v1236 = vunpack.c.l.b16 %v1159
        %v1237 = vunpack.c.l.b16 %v1160
        %v1238 = vunpack.c.l.b16 %v1161
        %v1239 = vunpack.c.l.b16 %v1162
        %v1240 = vunpack.c.l.b16 %v1163
        %v1241 = vunpack.c.l.b16 %v1164
        %v1242 = vunpack.c.l.b16 %v1165
        %v1243 = vunpack.c.l.b16 %v1166
        %v1244 = vunpack.c.l.b16 %v1167
        %v1245 = vunpack.c.l.b16 %v1168
        %v1246 = vunpack.c.l.b16 %v1169
        %v1247 = vunpack.c.l.b16 %v1170
        %v1248 = vunpack.c.l.b16 %v1171
        %v1249 = vunpack.c.l.b16 %v1172
        %v1250 = vunpack.c.l.b16 %v1173
        %v1251 = vunpack.c.l.b16 %v1174
        %v1252 = vunpack.c.l.b16 %v1175
        %v1253 = vunpack.c.l.b16 %v1176
        %v1254 = vunpack.c.l.b16 %v1177
        %v1255 = vunpack.c.l.b16 %v1178
        %v1256 = vunpack.c.l.b16 %v1179
        %v1257 = vunpack.c.l.b16 %v1180
        %v1258 = vunpack.c.l.b16 %v1181
        %v1259 = vunpack.c.l.b16 %v1182
        %v1260 = vunpack.c.l.b16 %v1183
        %v1261 = vunpack.c.l.b16 %v1184
        %v1262 = vunpack.c.l.b16 %v1185
        %v1263 = vunpack.c.l.b16 %v1186
        %v1264 = vunpack.c.l.b16 %v1187
        %v1265 = vunpack.c.l.b16 %v1188
        %v1266 = vunpack.c.l.b16 %v1189
        %v1267 = vunpack.c.l.b16 %v1190
        %v1268 = vpack.c.b16 %v1237, %v1236
        %v1269 = vpack.c.b16 %v1239, %v1238
        %v1270 = vpack.c.b16 %v1241, %v1240
        %v1271 = vpack.c.b16 %v1243, %v1242
        %v1272 = vpack.c.b16 %v1245, %v1244
        %v1273 = vpack.c.b16 %v1247, %v1246
        %v1274 = vpack.c.b16 %v1249, %v1248
        %v1275 = vpack.c.b16 %v1251, %v1250
        %v1276 = vpack.c.b16 %v1253, %v1252
        %v1277 = vpack.c.b16 %v1255, %v1254
        %v1278 = vpack.c.b16 %v1257, %v1256
        %v1279 = vpack.c.b16 %v1259, %v1258
        %v1280 = vpack.c.b16 %v1261, %v1260
        %v1281 = vpack.c.b16 %v1263, %v1262
        %v1282 = vpack.c.b16 %v1265, %v1264
        %v1283 = vpack.c.b16 %v1267, %v1266
        %1300 = vmatprep.subr.bf16.mxu0 0
        %1301 = vmatpush1.bf16.msra.mxu0 %v1268
        %1302 = vmatprep.subr.bf16.mxu0 0
        %1303 = vmatpush1.bf16.msra.mxu0 %v1269
        %1304 = vmatprep.subr.bf16.mxu0 0
        %1305 = vmatpush1.bf16.msra.mxu0 %v1270
        %1306 = vmatprep.subr.bf16.mxu0 0
        %1307 = vmatpush1.bf16.msra.mxu0 %v1271
        %1308 = vmatprep.subr.bf16.mxu0 0
        %1309 = vmatpush1.bf16.msra.mxu0 %v1272
        %1310 = vmatprep.subr.bf16.mxu0 0
        %1311 = vmatpush1.bf16.msra.mxu0 %v1273
        %1312 = vmatprep.subr.bf16.mxu0 0
        %1313 = vmatpush1.bf16.msra.mxu0 %v1274
        %1314 = vmatprep.subr.bf16.mxu0 0
        %1315 = vmatpush1.bf16.msra.mxu0 %v1275
        %1316 = vmatprep.subr.bf16.mxu0 0
        %1317 = vmatpush1.bf16.msra.mxu0 %v1276
        %1318 = vmatprep.subr.bf16.mxu0 0
        %1319 = vmatpush1.bf16.msra.mxu0 %v1277
        %1320 = vmatprep.subr.bf16.mxu0 0
        %1321 = vmatpush1.bf16.msra.mxu0 %v1278
        %1322 = vmatprep.subr.bf16.mxu0 0
        %1323 = vmatpush1.bf16.msra.mxu0 %v1279
        %1324 = vmatprep.subr.bf16.mxu0 0
        %1325 = vmatpush1.bf16.msra.mxu0 %v1280
        %1326 = vmatprep.subr.bf16.mxu0 0
        %1327 = vmatpush1.bf16.msra.mxu0 %v1281
        %1328 = vmatprep.subr.bf16.mxu0 0
        %1329 = vmatpush1.bf16.msra.mxu0 %v1282
        %1330 = vmatprep.subr.bf16.mxu0 0
        %1331 = vmatpush1.bf16.msra.mxu0 %v1283
        %1332 = vmatprep.mubr.bf16.mxu0 %v1192
        %1333 = vmatmul.mubr.bf16.gmra.mrb[0].mxu0 %v1191
        %v1334 = vpop.f32.mrb[0].mxu0
        %v1335 = vadd.f32 %v1203, %v1334
        %v1336 = vpop.f32.mrb[0].mxu0
        %v1337 = vpop.f32.mrb[0].mxu0
        %v1338 = vadd.f32 %v1203, %v1337
        %v1339 = vpop.f32.mrb[0].mxu0
        %1340 = vmatprep.mubr.bf16.mxu0 %v1194
        %1341 = vmatmul.mubr.bf16.gmra.mrb[0].mxu0 %v1193
        %v1342 = vpop.f32.mrb[0].mxu0
        %v1343 = vadd.f32 %v1203, %v1342
        %v1344 = vpop.f32.mrb[0].mxu0
        %v1345 = vpop.f32.mrb[0].mxu0
        %v1346 = vadd.f32 %v1203, %v1345
        %v1347 = vpop.f32.mrb[0].mxu0
        %1348 = vmatprep.mubr.bf16.mxu0 %v1196
        %1349 = vmatmul.mubr.bf16.gmra.mrb[0].mxu0 %v1195
        %v1350 = vpop.f32.mrb[0].mxu0
        %v1351 = vadd.f32 %v1203, %v1350
        %v1352 = vpop.f32.mrb[0].mxu0
        %v1353 = vpop.f32.mrb[0].mxu0
        %v1354 = vadd.f32 %v1203, %v1353
        %v1355 = vpop.f32.mrb[0].mxu0
        %1356 = vmatprep.mubr.bf16.mxu0 %v1198
        %1357 = vmatmul.mubr.bf16.gmra.mrb[0].mxu0 %v1197
        %v1358 = vpop.f32.mrb[0].mxu0
        %v1359 = vadd.f32 %v1203, %v1358
        %v1360 = vpop.f32.mrb[0].mxu0
        %v1361 = vpop.f32.mrb[0].mxu0
        %v1362 = vadd.f32 %v1203, %v1361
        %v1363 = vpop.f32.mrb[0].mxu0
        %1364 = vdwg.mxu0
        %v1365 = vmax.f32 %v1335, 0.0
        %v1366 = vmax.f32 %v1338, 0.0
        %v1367 = vmax.f32 %v1343, 0.0
        %v1368 = vmax.f32 %v1346, 0.0
        %v1369 = vmax.f32 %v1351, 0.0
        %v1370 = vmax.f32 %v1354, 0.0
        %v1371 = vmax.f32 %v1359, 0.0
        %v1372 = vmax.f32 %v1362, 0.0
        %v1373 = vadd.f32 %v1365, %v880
        %v1374 = vadd.f32 %v1366, %v881
        %v1375 = vadd.f32 %v1367, %v882
        %v1376 = vadd.f32 %v1368, %v883
        %v1377 = vadd.f32 %v1369, %v884
        %v1378 = vadd.f32 %v1370, %v885
        %v1379 = vadd.f32 %v1371, %v886
        %v1380 = vadd.f32 %v1372, %v887
        %v1381 = vmax.f32 %v1373, 0.0
        %v1382 = vmax.f32 %v1374, 0.0
        %v1383 = vmax.f32 %v1375, 0.0
        %v1384 = vmax.f32 %v1376, 0.0
        %v1385 = vmax.f32 %v1377, 0.0
        %v1386 = vmax.f32 %v1378, 0.0
        %v1387 = vmax.f32 %v1379, 0.0
        %v1388 = vmax.f32 %v1380, 0.0
        %vm1389 = vcmp.eq.s32.totalorder %v186, 63
        %vm1390 = vcmp.eq.s32.totalorder %v187, 63
        %vm1391 = vcmp.eq.s32.totalorder %v188, 63
        %vm1392 = vcmp.eq.s32.totalorder %v189, 63
        %vm1393 = vcmp.eq.s32.totalorder %v190, 63
        %vm1394 = vcmp.eq.s32.totalorder %v191, 63
        %vm1395 = vcmp.eq.s32.totalorder %v192, 63
        %vm1396 = vcmp.eq.s32.totalorder %v193, 63
        %v1397 = vsel %vm1389, %v1381, 0.0
        %v1398 = vsel %vm1390, %v1382, 0.0
        %v1399 = vsel %vm1391, %v1383, 0.0
        %v1400 = vsel %vm1392, %v1384, 0.0
        %v1401 = vsel %vm1393, %v1385, 0.0
        %v1402 = vsel %vm1394, %v1386, 0.0
        %v1403 = vsel %vm1395, %v1387, 0.0
        %v1404 = vsel %vm1396, %v1388, 0.0
        %v1405 = vadd.f32 %v1397, %v1398
        %v1406 = vadd.f32 %v1405, %v1399
        %v1407 = vadd.f32 %v1406, %v1400
        %v1408 = vadd.f32 %v1407, %v1401
        %v1409 = vadd.f32 %v1408, %v1402
        %v1410 = vadd.f32 %v1409, %v1403
        %v1411 = vadd.f32 %v1410, %v1404
        %v1412 = vrot.slane %v1411, 4
        %v1413 = vadd.f32 %v1411, %v1412
        %v1414 = vrot.slane %v1413, 2
        %v1415 = vadd.f32 %v1413, %v1414
        %v1416 = vrot.slane %v1415, 1
        %v1417 = vadd.f32 %v1415, %v1416
        %v1418 = vpack.c.bf16 %v1417, %v1417
        %v1419 = vld [vmem:[#allocation2 + $0x240] sm:$0xf]
        %v1420 = vld [vmem:[#allocation2 + $0x244] sm:$0xf]
        %v1421 = vld [vmem:[#allocation2 + $0x248] sm:$0xf]
        %v1422 = vld [vmem:[#allocation2 + $0x24c] sm:$0xf]
        %v1423 = vld [vmem:[#allocation2 + $0x250] sm:$0xf]
        %v1424 = vld [vmem:[#allocation2 + $0x254] sm:$0xf]
        %v1425 = vld [vmem:[#allocation2 + $0x258] sm:$0xf]
        %v1426 = vld [vmem:[#allocation2 + $0x25c] sm:$0xf]
        %v1427 = vld [vmem:[#allocation2 + $0x260] sm:$0xf]
        %v1428 = vld [vmem:[#allocation2 + $0x264] sm:$0xf]
        %v1429 = vld [vmem:[#allocation2 + $0x268] sm:$0xf]
        %v1430 = vld [vmem:[#allocation2 + $0x26c] sm:$0xf]
        %v1431 = vld [vmem:[#allocation2 + $0x270] sm:$0xf]
        %v1432 = vld [vmem:[#allocation2 + $0x274] sm:$0xf]
        %v1433 = vld [vmem:[#allocation2 + $0x278] sm:$0xf]
        %v1434 = vld [vmem:[#allocation2 + $0x27c] sm:$0xf]
        %v1435 = vld [vmem:[%s2 + $0x5] sm:$0x1]
        %v1452 = vunpack.c.l.b16 %v1419
        %v1453 = vunpack.c.l.b16 %v1420
        %v1454 = vunpack.c.l.b16 %v1421
        %v1455 = vunpack.c.l.b16 %v1422
        %v1456 = vunpack.c.l.b16 %v1423
        %v1457 = vunpack.c.l.b16 %v1424
        %v1458 = vunpack.c.l.b16 %v1425
        %v1459 = vunpack.c.l.b16 %v1426
        %v1460 = vunpack.c.l.b16 %v1427
        %v1461 = vunpack.c.l.b16 %v1428
        %v1462 = vunpack.c.l.b16 %v1429
        %v1463 = vunpack.c.l.b16 %v1430
        %v1464 = vunpack.c.l.b16 %v1431
        %v1465 = vunpack.c.l.b16 %v1432
        %v1466 = vunpack.c.l.b16 %v1433
        %v1467 = vunpack.c.l.b16 %v1434
        %v1468 = vpack.c.b16 %v1453, %v1452
        %v1469 = vpack.c.b16 %v1455, %v1454
        %v1470 = vpack.c.b16 %v1457, %v1456
        %v1471 = vpack.c.b16 %v1459, %v1458
        %v1472 = vpack.c.b16 %v1461, %v1460
        %v1473 = vpack.c.b16 %v1463, %v1462
        %v1474 = vpack.c.b16 %v1465, %v1464
        %v1475 = vpack.c.b16 %v1467, %v1466
        %1484 = vmatprep.subr.bf16.mxu0 0
        %1485 = vmatpush1.bf16.msra.mxu0 %v1468
        %1486 = vmatprep.subr.bf16.mxu0 0
        %1487 = vmatpush1.bf16.msra.mxu0 %v1469
        %1488 = vmatprep.subr.bf16.mxu0 0
        %1489 = vmatpush1.bf16.msra.mxu0 %v1470
        %1490 = vmatprep.subr.bf16.mxu0 0
        %1491 = vmatpush1.bf16.msra.mxu0 %v1471
        %1492 = vmatprep.subr.bf16.mxu0 0
        %1493 = vmatpush1.bf16.msra.mxu0 %v1472
        %1494 = vmatprep.subr.bf16.mxu0 0
        %1495 = vmatpush1.bf16.msra.mxu0 %v1473
        %1496 = vmatprep.subr.bf16.mxu0 0
        %1497 = vmatpush1.bf16.msra.mxu0 %v1474
        %1498 = vmatprep.subr.bf16.mxu0 0
        %1499 = vmatpush1.bf16.msra.mxu0 %v1475
        %1500 = vmatprep.subr.bf16.mxu0 0
        %1501 = vmatpush1.bf16.msra.mxu0 0
        %1502 = vmatprep.subr.bf16.mxu0 0
        %1503 = vmatpush1.bf16.msra.mxu0 0
        %1504 = vmatprep.subr.bf16.mxu0 0
        %1505 = vmatpush1.bf16.msra.mxu0 0
        %1506 = vmatprep.subr.bf16.mxu0 0
        %1507 = vmatpush1.bf16.msra.mxu0 0
        %1508 = vmatprep.subr.bf16.mxu0 0
        %1509 = vmatpush1.bf16.msra.mxu0 0
        %1510 = vmatprep.subr.bf16.mxu0 0
        %1511 = vmatpush1.bf16.msra.mxu0 0
        %1512 = vmatprep.subr.bf16.mxu0 0
        %1513 = vmatpush1.bf16.msra.mxu0 0
        %1514 = vmatprep.subr.bf16.mxu0 0
        %1515 = vmatpush1.bf16.msra.mxu0 0
        %1516 = vmatprep.mubr.bf16.mxu0 0
        %1517 = vmatmul.mubr.bf16.gmra.mrb[0].mxu0 %v1418
        %v1518 = vpop.f32.mrb[0].mxu0
        %v1519 = vadd.f32 %v1435, %v1518
        %v1520 = vpop.f32.mrb[0].mxu0
        %v1521 = vpop.f32.mrb[0].mxu0
        %v1522 = vpop.f32.mrb[0].mxu0
        %1523 = vdwg.mxu0
        %vm1524 = vcmp.lt.s32.totalorder %v195, 10
        %v1525 = vsel %vm1524, %v1519, -1e+30
        %vm1526 = vcmask 1040384
        %v1527 = vsel %vm1526, %v1525, -inf
        %1528 = vmax.xlane.f32.xlu0 %v1527
        %v1529 = vpop.xlane.xlu0 %1528
        %v1530 = vsub.f32 %v1525, %v1529
        %v1531 = vmul.f32 %v1530, 1.442695
        %v1532 = vpow.pop %v1531
        %v1533 = vsel %vm1524, %v1532, 0.0
        %v1534 = vsel %vm1526, %v1533, 0.0
        %1535 = vadd.xlane.f32.xlu0 %v1534
        %v1536 = vpop.xlane.xlu0 %1535
        %v1537 = vlog2.pop %v1536
        %v1538 = vmul.f32 %v1537, 0.6931472
        %v1539 = vadd.f32 %v1538, %v1529
        %v1540 = vsub.f32 %v1519, %v1539
        %v1541 = vlaneseq
        %v1542 = vshrl.u32 %v1541, 7
        %v1543 = vsub.s32 0, %v1542
        %v1544 = vrot.slane %v1540, %v1543
        %1545 = vst [vmem:[%s183] sm:$0xff] %v1544
        %p1546 = scmp.lt.s32.totalorder %s15, 1
        %s1547 = scalar_select %p1546, %s15, 1
        %s1548 = smul.addr %s1547, 8
        %s1549 = scalar_lea.vmem %s3, %s1548
        // Predicated region
        $region37: #{tcn_forward.1} parent=31 // pred_check
          %p1550 = pneg %p101
        $region38: #{tcn_forward.1} parent=31 // pred_check_branch
          %1552 = sbr.rel (%p1550) target = $region40
        $region39: #{tcn_forward.1} parent=31 // pred_region
          _
        $region40: #{tcn_forward.1} parent=31 // pred_fallthru
          _
      $region32: #{tcn_forward.1} parent=5 // pred_fallthru
        _
      %p1553 = scmp.le.s32.totalorder 2, %s10
      // Predicated region
      $region41: #{tcn_forward.1} parent=5 // pred_check
        %p1554 = pneg %p1553
      $region42: #{tcn_forward.1} parent=5 // pred_check_branch
        %1556 = sbr.rel (%p1554) target = $region44
      $region43: #{tcn_forward.1} parent=5 // pred_region
        %s1557 = ssub.s32 %s10, 2
        // Predicated region
        $region45: #{tcn_forward.1} parent=43 // pred_check
          %p1558 = pneg %p107
        $region46: #{tcn_forward.1} parent=43 // pred_check_branch
          %1560 = sbr.rel (%p1558) target = $region48
        $region47: #{tcn_forward.1} parent=43 // pred_region
          %p1561 = scmp.lt.s32.totalorder %s16, 1
          %s1562 = scalar_select %p1561, %s16, 1
          %s1563 = smul.addr %s1562, 8
          %s1564 = scalar_lea.vmem %s3, %s1563
        $region48: #{tcn_forward.1} parent=43 // pred_fallthru
          _
      $region44: #{tcn_forward.1} parent=5 // pred_fallthru
        _
    $region6: #{tcn_forward.1} parent=1 // loop_footer
      %s14 = sadd.s32 1, %s10
    $region7: #{tcn_forward.1} parent=1 // loop_footer_branch
      %9 = sbr.rel target = $region3
    $region8: #{tcn_forward.1} parent=1 // loop_exit
      _
    %1565 = vsyncpa [#allocation3], 1
    %s1566 = scalar_lea.sflag [#allocation3], 1
    %1567 = vsyncpa %s1566, 1

</llo_original>
